<compile_context>
chip_gen: v7x
topology: tpu7x:2x2x1
jax: 0.10.0
libtpu: 0.0.40
codegen_flags: <defaults>
</compile_context>

<pallas_src>
import functools

import jax
import jax.numpy as jnp
from jax.experimental import pallas as pl
from jax.experimental.pallas import tpu as pltpu

F_PAD = 128  # lane-dense padded projection width (multiple of 128)


def aagnn_kernel(adj_ref, feats_ref, w_ref, b_ref, mask_ref, out_ref):
    """Processes a block of Bt subgraphs per grid step.

    adj_ref   [Bt, N, N]      int8  (0/1 adjacency, cast in-kernel)
    feats_ref [Bt, N, F_in]   f32
    w_ref     [F_in, F_PAD]   f32   cols [0:F_out] = W^T, col F_PAD-2 = W^T a1^T,
                                    col F_PAD-1 = W^T a2^T, rest zero
    b_ref     [1, F_PAD]      f32   same packing for the bias
    mask_ref  [Bt, N, 1]      f32   node_mask as 0/1
    out_ref   [Bt, N, F_out]  f32
    """
    bt, n, f_in = feats_ref.shape
    f_out = out_ref.shape[-1]

    # Linear projection on the MXU with the batch flattened for full MXU fill:
    # [Bt*N, F_in] @ [F_in, F_PAD].  zi / zj come out of the last two columns.
    x = feats_ref[...].reshape(bt * n, f_in)
    z_flat = jnp.dot(x, w_ref[...], preferred_element_type=jnp.float32) + b_ref[...]
    z = z_flat.reshape(bt, n, F_PAD)
    zi = z[:, :, F_PAD - 2:F_PAD - 1]            # [Bt, N, 1]
    zj = z[:, :, F_PAD - 1:F_PAD]                # [Bt, N, 1]

    # Attention logits: adj*zi + adj*(eye*zj) == adj * where(i==j, zi+zj, zi).
    adj = adj_ref[...].astype(jnp.float32)       # int8 -> f32 (0/1 exact)
    rows = jax.lax.broadcasted_iota(jnp.int32, (n, n), 0)
    cols = jax.lax.broadcasted_iota(jnp.int32, (n, n), 1)
    diag = (rows == cols)[None]                  # [1, N, N], shared across batch
    att = adj * jnp.where(diag, zi + zj, zi)     # [Bt, N, N]
    att = jnp.where(att >= 0.0, att, 0.01 * att)            # LeakyReLU(0.01)

    # Rowwise max subtraction cancels exactly in the normalization below but
    # guards exp overflow for large logits.
    att = att - jnp.max(att, axis=-1, keepdims=True)
    e = jnp.exp(att) * adj
    row_sum = jnp.sum(e, axis=-1, keepdims=True)             # [Bt, N, 1]
    # EUP reciprocal (frees VALU); eps guard against zero-degree rows.
    p = e * pl.reciprocal(jnp.maximum(row_sum, 1e-30), approx=True)

    # Neighborhood aggregation att @ z in bf16 on the MXU, f32 accumulation.
    agg = jnp.einsum("bij,bjo->bio",
                     p.astype(jnp.bfloat16), z.astype(jnp.bfloat16),
                     preferred_element_type=jnp.float32)
    h = z - agg

    # ReLU + fixed-shape node masking; store only the real F_out columns.
    out_ref[...] = jnp.maximum(h[..., :f_out], 0.0) * mask_ref[...]


def prepare_params(weight, bias, a_1, a_2, f_pad=F_PAD):
    """weight: [F_out, F_in] (torch nn.Linear layout), bias: [F_out] or [1,F_out],
    a_1 / a_2: [1, F_out].  Returns lane-dense padded W [F_in, F_PAD] and bias
    [1, F_PAD] with the zi / zj projections folded into the last two columns."""
    f_out, f_in = weight.shape
    w_t = jnp.asarray(weight, jnp.float32).T               # [F_in, F_out]
    b = jnp.reshape(jnp.asarray(bias, jnp.float32), (-1,))
    a1 = jnp.reshape(jnp.asarray(a_1, jnp.float32), (-1,))
    a2 = jnp.reshape(jnp.asarray(a_2, jnp.float32), (-1,))

    w_pad = jnp.zeros((f_in, f_pad), jnp.float32)
    w_pad = w_pad.at[:, :f_out].set(w_t)
    w_pad = w_pad.at[:, f_pad - 2].set(w_t @ a1)
    w_pad = w_pad.at[:, f_pad - 1].set(w_t @ a2)

    b_pad = jnp.zeros((1, f_pad), jnp.float32)
    b_pad = b_pad.at[0, :f_out].set(b)
    b_pad = b_pad.at[0, f_pad - 2].set(jnp.dot(b, a1))
    b_pad = b_pad.at[0, f_pad - 1].set(jnp.dot(b, a2))
    return w_pad, b_pad


@functools.partial(jax.jit, static_argnames=("f_out", "block_batch"))
def aagnn_forward(adj_i8, subgraph_feats, node_mask, w_pad, b_pad, *,
                  f_out, block_batch=2):
    """adj_i8: [B,N,N] int8 0/1 adjacency, subgraph_feats: [B,N,F_in] f32,
    node_mask: [B,N] bool.  Returns [B, N, f_out] = relu(z - att@z) with
    masked-out rows zeroed (fixed-shape stand-in for the torch boolean gather)."""
    b_sz, n, f_in = subgraph_feats.shape
    assert adj_i8.dtype == jnp.int8, "pass the 0/1 adjacency already as int8"
    assert b_sz % block_batch == 0
    n_steps = b_sz // block_batch
    mask_f = node_mask.astype(jnp.float32)[..., None]        # [B, N, 1]

    cost = pl.CostEstimate(
        flops=2 * b_sz * n * F_PAD * (f_in + n),
        transcendentals=b_sz * n * n,
        bytes_accessed=(b_sz * n * n                          # adj (int8)
                        + b_sz * n * f_in * 4                 # feats
                        + b_sz * n * 4                        # mask
                        + f_in * F_PAD * 4 + F_PAD * 4        # params
                        + b_sz * n * f_out * 4),              # output
    )

    return pl.pallas_call(
        aagnn_kernel,
        out_shape=jax.ShapeDtypeStruct((b_sz, n, f_out), jnp.float32),
        grid_spec=pltpu.PrefetchScalarGridSpec(
            num_scalar_prefetch=0,
            grid=(n_steps,),
            in_specs=[
                pl.BlockSpec((block_batch, n, n), lambda i: (i, 0, 0)),     # adj
                pl.BlockSpec((block_batch, n, f_in), lambda i: (i, 0, 0)),  # feats
                pl.BlockSpec((f_in, F_PAD), lambda i: (0, 0)),              # W_pad
                pl.BlockSpec((1, F_PAD), lambda i: (0, 0)),                 # b_pad
                pl.BlockSpec((block_batch, n, 1), lambda i: (i, 0, 0)),     # mask
            ],
            out_specs=pl.BlockSpec((block_batch, n, f_out), lambda i: (i, 0, 0)),
        ),
        compiler_params=pltpu.CompilerParams(
            dimension_semantics=("parallel",)),   # shards steps across TCs (v7x)
        cost_estimate=cost,
    )(adj_i8, subgraph_feats, w_pad, b_pad, mask_f)


def aagnn_reference(adj, subgraph_feats, node_mask, weight, bias, a_1, a_2):
    """Pure-JAX reference matching the PyTorch module (masked rows zeroed)."""
    z = jnp.einsum("bnf,of->bno", subgraph_feats, weight) + jnp.reshape(bias, (-1,))
    zi = jnp.sum(a_1 * z, axis=-1, keepdims=True)
    zj = jnp.sum(a_2 * z, axis=-1, keepdims=True)
    eye = jnp.eye(adj.shape[-1], dtype=jnp.float32)
    att = adj * zi + adj * (eye * zj)
    att = jnp.where(att >= 0.0, att, 0.01 * att)
    att = jnp.exp(att) * adj
    att = att / jnp.sum(att, axis=-1, keepdims=True)
    h = z - jnp.einsum("bij,bjo->bio", att, z)
    return jnp.maximum(h, 0.0) * node_mask[..., None].astype(jnp.float32)


if __name__ == "__main__":
    B = 4            # total subgraphs
    BT = 2           # subgraphs per grid step (grid = B/BT = 2 -> both TCs busy)
    N = 128          # nodes per subgraph
    F_IN = 64        # in_feats
    F_OUT = 32       # out_feats

    key = jax.random.PRNGKey(0)
    k_adj, k_feat, k_w, k_b, k_a1, k_a2, k_mask = jax.random.split(key, 7)

    # Symmetric 0/1 adjacency with self-loops (keeps row sums > 0).
    rand = jax.random.uniform(k_adj, (B, N, N))
    adj_f = (rand + jnp.swapaxes(rand, 1, 2) > 1.6).astype(jnp.float32)
    adj_f = jnp.maximum(adj_f, jnp.eye(N, dtype=jnp.float32)[None])
    adj_i8 = adj_f.astype(jnp.int8)              # 0/1 exact; 1/4 the DMA bytes

    subgraph_feats = jax.random.normal(k_feat, (B, N, F_IN), dtype=jnp.float32)

    # nn.Linear default init: U(-1/sqrt(in), 1/sqrt(in)); a_1, a_2 = rand(1, out).
    bound = 1.0 / jnp.sqrt(float(F_IN))
    weight = jax.random.uniform(k_w, (F_OUT, F_IN), minval=-bound,
                                maxval=bound).astype(jnp.float32)
    bias = jax.random.uniform(k_b, (F_OUT,), minval=-bound,
                              maxval=bound).astype(jnp.float32)
    a_1 = jax.random.uniform(k_a1, (1, F_OUT)).astype(jnp.float32)
    a_2 = jax.random.uniform(k_a2, (1, F_OUT)).astype(jnp.float32)

    node_mask = jax.random.uniform(k_mask, (B, N)) > 0.5

    w_pad, b_pad = prepare_params(weight, bias, a_1, a_2)
    out = aagnn_forward(adj_i8, subgraph_feats, node_mask, w_pad, b_pad,
                        f_out=F_OUT, block_batch=BT)
    out = jax.block_until_ready(out)

    # Sanity + correctness checks (loose tolerance: bf16 att@z + approx recip).
    # TODO(synk): the torch reference returns relu(h)[node_mask] (dynamic shape);
    # here masked-out rows are zeroed instead so the output stays fixed-shape.
    ref = aagnn_reference(adj_f, subgraph_feats, node_mask, weight, bias, a_1, a_2)
    assert out.shape == (B, N, F_OUT)
    assert bool(jnp.all(jnp.isfinite(out)))
    assert bool(jnp.all(out >= 0.0))
    assert bool(jnp.allclose(out, ref, rtol=5e-2, atol=5e-2))

    print("KERNEL_OK")
</pallas_src>

<mosaic_0001>
module attributes {stable_mosaic.version = 11 : i64} {
  func.func @aagnn_kernel(%arg0: i32, %arg1: memref<2x128x128xi8, #tpu.memory_space<vmem>>, %arg2: memref<2x128x64xf32, #tpu.memory_space<vmem>>, %arg3: memref<64x128xf32, #tpu.memory_space<vmem>>, %arg4: memref<1x128xf32, #tpu.memory_space<vmem>>, %arg5: memref<2x128x1xf32, #tpu.memory_space<vmem>>, %arg6: memref<2x128x32xf32, #tpu.memory_space<vmem>>) attributes {dimension_semantics = [#tpu.dimension_semantics<parallel>], iteration_bounds = array<i64: 2>, scalar_prefetch = 0 : i64, scratch_operands = 0 : i64, tpu.core_type = #tpu.core_type<tc>, window_params = [{transform_indices = @transform_0, window_bounds = array<i64: 2, 128, 128>}, {transform_indices = @transform_1, window_bounds = array<i64: 2, 128, 64>}, {pipeline_mode = #tpu.pipeline_mode<synchronous>, transform_indices = @transform_2, window_bounds = array<i64: 64, 128>}, {pipeline_mode = #tpu.pipeline_mode<synchronous>, transform_indices = @transform_3, window_bounds = array<i64: 1, 128>}, {transform_indices = @transform_4, window_bounds = array<i64: 2, 128, 1>}, {transform_indices = @transform_5, window_bounds = array<i64: 2, 128, 32>}]} {
    %c0 = arith.constant 0 : index
    %c0_0 = arith.constant 0 : index
    %c0_1 = arith.constant 0 : index
    %0 = vector.load %arg2[%c0, %c0_0, %c0_1] : memref<2x128x64xf32, #tpu.memory_space<vmem>>, vector<2x128x64xf32>
    %1 = vector.shape_cast %0 : vector<2x128x64xf32> to vector<256x64xf32>
    %c0_2 = arith.constant 0 : index
    %c0_3 = arith.constant 0 : index
    %2 = vector.load %arg3[%c0_2, %c0_3] : memref<64x128xf32, #tpu.memory_space<vmem>>, vector<64x128xf32>
    %cst = arith.constant dense<0.000000e+00> : vector<256x128xf32>
    %3 = tpu.matmul %1, %2, %cst {dimension_numbers = #tpu.dot_dimension_numbers<[1], [0], [0], [1], [0, 0, 1, 1], [], []>} : vector<256x64xf32>, vector<64x128xf32>, vector<256x128xf32> -> vector<256x128xf32>
    %c0_4 = arith.constant 0 : index
    %c0_5 = arith.constant 0 : index
    %4 = vector.load %arg4[%c0_4, %c0_5] : memref<1x128xf32, #tpu.memory_space<vmem>>, vector<1x128xf32>
    %5 = vector.broadcast %4 : vector<1x128xf32> to vector<256x128xf32>
    %6 = arith.addf %3, %5 : vector<256x128xf32>
    %7 = vector.shape_cast %6 : vector<256x128xf32> to vector<2x128x128xf32>
    %8 = vector.extract_strided_slice %7 {offsets = [0, 0, 126], sizes = [2, 128, 1], strides = [1, 1, 1]} : vector<2x128x128xf32> to vector<2x128x1xf32>
    %9 = vector.extract_strided_slice %7 {offsets = [0, 0, 127], sizes = [2, 128, 1], strides = [1, 1, 1]} : vector<2x128x128xf32> to vector<2x128x1xf32>
    %c0_6 = arith.constant 0 : index
    %c0_7 = arith.constant 0 : index
    %c0_8 = arith.constant 0 : index
    %10 = vector.load %arg1[%c0_6, %c0_7, %c0_8] : memref<2x128x128xi8, #tpu.memory_space<vmem>>, vector<2x128x128xi8>
    %11 = arith.sitofp %10 : vector<2x128x128xi8> to vector<2x128x128xf32>
    %12 = tpu.iota {dimensions = array<i32: 0>} : vector<128x128xi32>
    %13 = tpu.iota {dimensions = array<i32: 1>} : vector<128x128xi32>
    %14 = arith.cmpi eq, %12, %13 : vector<128x128xi32>
    %15 = vector.shape_cast %14 : vector<128x128xi1> to vector<1x128x128xi1>
    %16 = arith.addf %8, %9 : vector<2x128x1xf32>
    %17 = vector.shape_cast %15 : vector<1x128x128xi1> to vector<1x128x128xi1>
    %18 = vector.broadcast %17 : vector<1x128x128xi1> to vector<2x128x128xi1>
    %19 = vector.shape_cast %16 : vector<2x128x1xf32> to vector<2x128x1xf32>
    %20 = vector.broadcast %19 : vector<2x128x1xf32> to vector<2x128x128xf32>
    %21 = vector.shape_cast %8 : vector<2x128x1xf32> to vector<2x128x1xf32>
    %22 = vector.broadcast %21 : vector<2x128x1xf32> to vector<2x128x128xf32>
    %23 = arith.select %18, %20, %22 : vector<2x128x128xi1>, vector<2x128x128xf32>
    %24 = arith.mulf %11, %23 : vector<2x128x128xf32>
    %cst_9 = arith.constant 0.000000e+00 : f32
    %25 = vector.broadcast %cst_9 : f32 to vector<2x128x128xf32>
    %26 = arith.cmpf oge, %24, %25 : vector<2x128x128xf32>
    %cst_10 = arith.constant 0.00999999977 : f32
    %27 = vector.broadcast %cst_10 : f32 to vector<2x128x128xf32>
    %28 = arith.mulf %27, %24 : vector<2x128x128xf32>
    %29 = arith.select %26, %24, %28 : vector<2x128x128xi1>, vector<2x128x128xf32>
    %cst_11 = arith.constant dense<0xFF800000> : vector<2x128xf32>
    %30 = vector.multi_reduction <maximumf>, %29, %cst_11 [2] : vector<2x128x128xf32> to vector<2x128xf32>
    %31 = vector.shape_cast %30 : vector<2x128xf32> to vector<2x128x1xf32>
    %32 = vector.broadcast %31 : vector<2x128x1xf32> to vector<2x128x128xf32>
    %33 = arith.subf %29, %32 : vector<2x128x128xf32>
    %34 = math.exp %33 : vector<2x128x128xf32>
    %35 = arith.mulf %34, %11 : vector<2x128x128xf32>
    %cst_12 = arith.constant dense<0.000000e+00> : vector<2x128xf32>
    %36 = vector.multi_reduction <add>, %35, %cst_12 [2] : vector<2x128x128xf32> to vector<2x128xf32>
    %37 = vector.shape_cast %36 : vector<2x128xf32> to vector<2x128x1xf32>
    %cst_13 = arith.constant 1.000000e-30 : f32
    %38 = vector.broadcast %cst_13 : f32 to vector<2x128x1xf32>
    %39 = arith.maximumf %37, %38 : vector<2x128x1xf32>
    %40 = tpu.reciprocal %39 {approx = true} : vector<2x128x1xf32> -> vector<2x128x1xf32>
    %41 = vector.broadcast %40 : vector<2x128x1xf32> to vector<2x128x128xf32>
    %42 = arith.mulf %35, %41 : vector<2x128x128xf32>
    %43 = arith.truncf %42 : vector<2x128x128xf32> to vector<2x128x128xbf16>
    %44 = arith.truncf %7 : vector<2x128x128xf32> to vector<2x128x128xbf16>
    "tpu.trace_start"() <{level = 10 : i32, message = "bij,bjo->bio"}> : () -> ()
    %cst_14 = arith.constant dense<0.000000e+00> : vector<2x128x128xf32>
    %45 = tpu.matmul %43, %44, %cst_14 {dimension_numbers = #tpu.dot_dimension_numbers<[2], [1], [1], [2], [0, 0, 0, 1, 1, 2], [0], [0]>} : vector<2x128x128xbf16>, vector<2x128x128xbf16>, vector<2x128x128xf32> -> vector<2x128x128xf32>
    "tpu.trace_stop"() : () -> ()
    %46 = arith.subf %7, %45 : vector<2x128x128xf32>
    %47 = vector.extract_strided_slice %46 {offsets = [0, 0, 0], sizes = [2, 128, 32], strides = [1, 1, 1]} : vector<2x128x128xf32> to vector<2x128x32xf32>
    %cst_15 = arith.constant 0.000000e+00 : f32
    %48 = vector.broadcast %cst_15 : f32 to vector<2x128x32xf32>
    %49 = arith.maximumf %47, %48 : vector<2x128x32xf32>
    %c0_16 = arith.constant 0 : index
    %c0_17 = arith.constant 0 : index
    %c0_18 = arith.constant 0 : index
    %50 = vector.load %arg5[%c0_16, %c0_17, %c0_18] : memref<2x128x1xf32, #tpu.memory_space<vmem>>, vector<2x128x1xf32>
    %51 = vector.broadcast %50 : vector<2x128x1xf32> to vector<2x128x32xf32>
    %52 = arith.mulf %49, %51 : vector<2x128x32xf32>
    %c0_19 = arith.constant 0 : index
    %c0_20 = arith.constant 0 : index
    %c0_21 = arith.constant 0 : index
    %53 = vector.load %arg6[%c0_19, %c0_20, %c0_21] : memref<2x128x32xf32, #tpu.memory_space<vmem>>, vector<2x128x32xf32>
    tpu.vector_store %arg6[%c0_19, %c0_20, %c0_21], %52 {strides = array<i32>} : memref<2x128x32xf32, #tpu.memory_space<vmem>>, vector<2x128x32xf32>,
    return
  }
  func.func @transform_0(%arg0: i32) -> (i32, i32, i32) {
    %c0_i32 = arith.constant 0 : i32
    %c0_i32_0 = arith.constant 0 : i32
    %c0_i32_1 = arith.constant 0 : i32
    return %arg0, %c0_i32, %c0_i32_0 : i32, i32, i32
  }
  func.func @transform_1(%arg0: i32) -> (i32, i32, i32) {
    %c0_i32 = arith.constant 0 : i32
    %c0_i32_0 = arith.constant 0 : i32
    %c0_i32_1 = arith.constant 0 : i32
    return %arg0, %c0_i32, %c0_i32_0 : i32, i32, i32
  }
  func.func @transform_2(%arg0: i32) -> (i32, i32) {
    %c0_i32 = arith.constant 0 : i32
    %c0_i32_0 = arith.constant 0 : i32
    %c0_i32_1 = arith.constant 0 : i32
    return %c0_i32, %c0_i32_0 : i32, i32
  }
  func.func @transform_3(%arg0: i32) -> (i32, i32) {
    %c0_i32 = arith.constant 0 : i32
    %c0_i32_0 = arith.constant 0 : i32
    %c0_i32_1 = arith.constant 0 : i32
    return %c0_i32, %c0_i32_0 : i32, i32
  }
  func.func @transform_4(%arg0: i32) -> (i32, i32, i32) {
    %c0_i32 = arith.constant 0 : i32
    %c0_i32_0 = arith.constant 0 : i32
    %c0_i32_1 = arith.constant 0 : i32
    return %arg0, %c0_i32, %c0_i32_0 : i32, i32, i32
  }
  func.func @transform_5(%arg0: i32) -> (i32, i32, i32) {
    %c0_i32 = arith.constant 0 : i32
    %c0_i32_0 = arith.constant 0 : i32
    %c0_i32_1 = arith.constant 0 : i32
    return %arg0, %c0_i32, %c0_i32_0 : i32, i32, i32
  }
}

</mosaic_0001>

<llo_original>
// kernel: aagnn_forward.1
$region0: #{aagnn_forward.1}
  #allocation0 [shape = 'u32[]', space=smem, size = 0x4, offset = 0x4, fixed_abs, tag = 'smem constant byte address 0x4 - core index']
  #allocation1 [shape = 'u32[144,128]{1,0:T(1,128)}', space=vmem, size = 0x12000, scoped, tag = 'internal scratch']
  %s0 = inlined_call_operand.vmem [shape: s8[4,128,128], index: 0, kind: input, shape index: {}]
  %s1 = inlined_call_operand.vmem [shape: f32[4,128,64], index: 1, kind: input, shape index: {}]
  %s2 = inlined_call_operand.vmem [shape: f32[64,128], index: 2, kind: input, shape index: {}]
  %s3 = inlined_call_operand.vmem [shape: f32[1,128], index: 3, kind: input, shape index: {}]
  %s4 = inlined_call_operand.vmem [shape: f32[4,128,1], index: 4, kind: input, shape index: {}]
  %s5 = inlined_call_operand.vmem [shape: f32[4,128,32], index: 5, kind: output, shape index: {}]
  %s6 = sld [smem:[#allocation0]]
  $region53: #{aagnn_forward.1} parent=0
    _
  %s8 = ssub.s32 1, %s6
  %s9 = scalar_select 0, %s8, %s6
  loop: start=0, step=1, limit=4
  $region2: #{aagnn_forward.1} parent=0 // loop_pre_header
    _
  $region3: #{aagnn_forward.1} parent=0 // loop_header
    %s11 = sphi 0, %s15
    %p12 = scmp.ge.s32.totalorder %s11, 4
    %s21 = sphi 0, %s23
    %s24 = sphi 0, %s21
    %s25 = sphi 0, %s24
    %s41 = sphi 0, %s25
    %s47 = sphi 0, %s49
    %s50 = sphi 0, %s47
    %s51 = sphi 0, %s50
    %s67 = sphi 0, %s51
    %s71 = sphi 0, %s71
    %s73 = sphi 0, %s71
    %s74 = sphi 0, %s73
    %s88 = sphi 0, %s74
    %s92 = sphi 0, %s92
    %s94 = sphi 0, %s92
    %s95 = sphi 0, %s94
    %s109 = sphi 0, %s95
    %s115 = sphi 0, %s117
    %s118 = sphi 0, %s115
    %s119 = sphi 0, %s118
    %s135 = sphi 0, %s119
    %s141 = sphi 0, %s143
    %s144 = sphi 0, %s141
    %s145 = sphi 0, %s144
    %s161 = sphi 0, %s145
  $region4: #{aagnn_forward.1} parent=0 // loop_header_branch
    %14 = sbr.rel (%p12) target = $region8
  $region5: #{aagnn_forward.1} parent=0 // loop_body
    %s16 = ssub.s32 %s11, 1
    %s17 = ssub.s32 %s11, 2
    %s18 = sadd.s32 %s11, 1
    %s19 = ssub.s32 %s11, %s18
    %p20 = scmp.eq.s32.totalorder %s19, 0
    %s22 = sadd.s32 %s21, 1
    %s23 = scalar_select %p20, %s21, %s22
    %p26 = pneg %p20
    %p27 = scmp.eq.s32.totalorder %s11, 1
    %p28 = por %p26, %p27
    %p29 = scmp.ne.s32.totalorder %s21, %s24
    %p30 = scmp.eq.s32.totalorder %s11, 0
    %p31 = por %p29, %p30
    %p32 = scmp.ne.s32.totalorder %s21, %s24
    %p33 = scmp.eq.s32.totalorder %s16, 1
    %p34 = por %p32, %p33
    %p35 = scmp.ne.s32.totalorder %s24, %s25
    %p36 = scmp.eq.s32.totalorder %s16, 0
    %p37 = por %p35, %p36
    %p38 = scmp.ne.s32.totalorder %s24, %s25
    %p39 = scmp.eq.s32.totalorder %s17, 1
    %p40 = por %p38, %p39
    %p42 = scmp.ne.s32.totalorder %s25, %s41
    %p43 = scmp.eq.s32.totalorder %s17, 0
    %p44 = por %p42, %p43
    %s45 = ssub.s32 %s11, %s18
    %p46 = scmp.eq.s32.totalorder %s45, 0
    %s48 = sadd.s32 %s47, 1
    %s49 = scalar_select %p46, %s47, %s48
    %p52 = pneg %p46
    %p53 = scmp.eq.s32.totalorder %s11, 1
    %p54 = por %p52, %p53
    %p55 = scmp.ne.s32.totalorder %s47, %s50
    %p56 = scmp.eq.s32.totalorder %s11, 0
    %p57 = por %p55, %p56
    %p58 = scmp.ne.s32.totalorder %s47, %s50
    %p59 = scmp.eq.s32.totalorder %s16, 1
    %p60 = por %p58, %p59
    %p61 = scmp.ne.s32.totalorder %s50, %s51
    %p62 = scmp.eq.s32.totalorder %s16, 0
    %p63 = por %p61, %p62
    %p64 = scmp.ne.s32.totalorder %s50, %s51
    %p65 = scmp.eq.s32.totalorder %s17, 1
    %p66 = por %p64, %p65
    %p68 = scmp.ne.s32.totalorder %s51, %s67
    %p69 = scmp.eq.s32.totalorder %s17, 0
    %p70 = por %p68, %p69
    %s72 = sadd.s32 %s71, 1
    %p75 = scmp.eq.s32.totalorder %s11, 1
    %p76 = scmp.ne.s32.totalorder %s71, %s73
    %p77 = scmp.eq.s32.totalorder %s11, 0
    %p78 = por %p76, %p77
    %p79 = scmp.ne.s32.totalorder %s71, %s73
    %p80 = scmp.eq.s32.totalorder %s16, 1
    %p81 = por %p79, %p80
    %p82 = scmp.ne.s32.totalorder %s73, %s74
    %p83 = scmp.eq.s32.totalorder %s16, 0
    %p84 = por %p82, %p83
    %p85 = scmp.ne.s32.totalorder %s73, %s74
    %p86 = scmp.eq.s32.totalorder %s17, 1
    %p87 = por %p85, %p86
    %p89 = scmp.ne.s32.totalorder %s74, %s88
    %p90 = scmp.eq.s32.totalorder %s17, 0
    %p91 = por %p89, %p90
    %s93 = sadd.s32 %s92, 1
    %p96 = scmp.eq.s32.totalorder %s11, 1
    %p97 = scmp.ne.s32.totalorder %s92, %s94
    %p98 = scmp.eq.s32.totalorder %s11, 0
    %p99 = por %p97, %p98
    %p100 = scmp.ne.s32.totalorder %s92, %s94
    %p101 = scmp.eq.s32.totalorder %s16, 1
    %p102 = por %p100, %p101
    %p103 = scmp.ne.s32.totalorder %s94, %s95
    %p104 = scmp.eq.s32.totalorder %s16, 0
    %p105 = por %p103, %p104
    %p106 = scmp.ne.s32.totalorder %s94, %s95
    %p107 = scmp.eq.s32.totalorder %s17, 1
    %p108 = por %p106, %p107
    %p110 = scmp.ne.s32.totalorder %s95, %s109
    %p111 = scmp.eq.s32.totalorder %s17, 0
    %p112 = por %p110, %p111
    %s113 = ssub.s32 %s11, %s18
    %p114 = scmp.eq.s32.totalorder %s113, 0
    %s116 = sadd.s32 %s115, 1
    %s117 = scalar_select %p114, %s115, %s116
    %p120 = pneg %p114
    %p121 = scmp.eq.s32.totalorder %s11, 1
    %p122 = por %p120, %p121
    %p123 = scmp.ne.s32.totalorder %s115, %s118
    %p124 = scmp.eq.s32.totalorder %s11, 0
    %p125 = por %p123, %p124
    %p126 = scmp.ne.s32.totalorder %s115, %s118
    %p127 = scmp.eq.s32.totalorder %s16, 1
    %p128 = por %p126, %p127
    %p129 = scmp.ne.s32.totalorder %s118, %s119
    %p130 = scmp.eq.s32.totalorder %s16, 0
    %p131 = por %p129, %p130
    %p132 = scmp.ne.s32.totalorder %s118, %s119
    %p133 = scmp.eq.s32.totalorder %s17, 1
    %p134 = por %p132, %p133
    %p136 = scmp.ne.s32.totalorder %s119, %s135
    %p137 = scmp.eq.s32.totalorder %s17, 0
    %p138 = por %p136, %p137
    %s139 = ssub.s32 %s11, %s18
    %p140 = scmp.eq.s32.totalorder %s139, 0
    %s142 = sadd.s32 %s141, 1
    %s143 = scalar_select %p140, %s141, %s142
    %p146 = pneg %p140
    %p147 = scmp.eq.s32.totalorder %s11, 1
    %p148 = por %p146, %p147
    %p149 = scmp.ne.s32.totalorder %s141, %s144
    %p150 = scmp.eq.s32.totalorder %s11, 0
    %p151 = por %p149, %p150
    %p152 = scmp.ne.s32.totalorder %s141, %s144
    %p153 = scmp.eq.s32.totalorder %s16, 1
    %p154 = por %p152, %p153
    %p155 = scmp.ne.s32.totalorder %s144, %s145
    %p156 = scmp.eq.s32.totalorder %s16, 0
    %p157 = por %p155, %p156
    %p158 = scmp.ne.s32.totalorder %s144, %s145
    %p159 = scmp.eq.s32.totalorder %s17, 1
    %p160 = por %p158, %p159
    %p162 = scmp.ne.s32.totalorder %s145, %s161
    %p163 = scmp.eq.s32.totalorder %s17, 0
    %p164 = por %p162, %p163
    %p165 = scmp.le.s32.totalorder 1, %s11
    %p166 = scmp.lt.s32.totalorder %s11, 3
    %p167 = pnand %p165, %p166
    %p168 = pneg %p167
    // Predicated region
    $region9: #{aagnn_forward.1} parent=5 // pred_check
      _
    $region10: #{aagnn_forward.1} parent=5 // pred_check_branch
      %170 = sbr.rel (%p167) target = $region12
    $region11: #{aagnn_forward.1} parent=5 // pred_region
      %s171 = ssub.s32 %s11, 1
      // Predicated region
      $region13: #{aagnn_forward.1} parent=11 // pred_check
        %p172 = pneg %p84
      $region14: #{aagnn_forward.1} parent=11 // pred_check_branch
        %174 = sbr.rel (%p172) target = $region16
      $region15: #{aagnn_forward.1} parent=11 // pred_region
        _
      $region16: #{aagnn_forward.1} parent=11 // pred_fallthru
        _
      // Predicated region
      $region17: #{aagnn_forward.1} parent=11 // pred_check
        %p175 = pneg %p105
      $region18: #{aagnn_forward.1} parent=11 // pred_check_branch
        %177 = sbr.rel (%p175) target = $region20
      $region19: #{aagnn_forward.1} parent=11 // pred_region
        _
      $region20: #{aagnn_forward.1} parent=11 // pred_fallthru
        _
    $region12: #{aagnn_forward.1} parent=5 // pred_fallthru
      _
    %p178 = scmp.lt.s32.totalorder %s11, 2
    // Predicated region
    $region21: #{aagnn_forward.1} parent=5 // pred_check
      %p179 = pneg %p178
    $region22: #{aagnn_forward.1} parent=5 // pred_check_branch
      %181 = sbr.rel (%p179) target = $region24
    $region23: #{aagnn_forward.1} parent=5 // pred_region
      // Predicated region
      $region25: #{aagnn_forward.1} parent=23 // pred_check
        %p182 = pneg %p31
      $region26: #{aagnn_forward.1} parent=23 // pred_check_branch
        %184 = sbr.rel (%p182) target = $region28
      $region27: #{aagnn_forward.1} parent=23 // pred_region
        %s185 = smul.u32 2, %s11
        %p186 = scmp.lt.s32.totalorder %s185, 3
        %s187 = scalar_select %p186, %s185, 3
        %s188 = smul.addr %s187, 4
        %s189 = smul.addr %s188, 8
        %s190 = scalar_lea.vmem %s0, %s189
        %s191 = smul.u32 2, %s11
      $region28: #{aagnn_forward.1} parent=23 // pred_fallthru
        _
      // Predicated region
      $region29: #{aagnn_forward.1} parent=23 // pred_check
        %p192 = pneg %p57
      $region30: #{aagnn_forward.1} parent=23 // pred_check_branch
        %194 = sbr.rel (%p192) target = $region32
      $region31: #{aagnn_forward.1} parent=23 // pred_region
        %s195 = smul.u32 2, %s11
        %p196 = scmp.lt.s32.totalorder %s195, 3
        %s197 = scalar_select %p196, %s195, 3
        %s198 = smul.addr %s197, 16
        %s199 = smul.addr %s198, 8
        %s200 = scalar_lea.vmem %s1, %s199
        %s201 = smul.u32 2, %s11
      $region32: #{aagnn_forward.1} parent=23 // pred_fallthru
        _
      // Predicated region
      $region33: #{aagnn_forward.1} parent=23 // pred_check
        %p202 = pneg %p125
      $region34: #{aagnn_forward.1} parent=23 // pred_check_branch
        %204 = sbr.rel (%p202) target = $region36
      $region35: #{aagnn_forward.1} parent=23 // pred_region
        %s205 = smul.u32 2, %s11
        %p206 = scmp.lt.s32.totalorder %s205, 3
        %s207 = scalar_select %p206, %s205, 3
        %s208 = smul.addr %s207, 16
        %s209 = smul.addr %s208, 8
        %s210 = scalar_lea.vmem %s4, %s209
        %s211 = smul.u32 2, %s11
      $region36: #{aagnn_forward.1} parent=23 // pred_fallthru
        _
    $region24: #{aagnn_forward.1} parent=5 // pred_fallthru
      _
    %p212 = scmp.le.s32.totalorder 1, %s11
    %p213 = scmp.lt.s32.totalorder %s11, 3
    %p214 = pnand %p212, %p213
    %p215 = pneg %p214
    // Predicated region
    $region37: #{aagnn_forward.1} parent=5 // pred_check
      _
    $region38: #{aagnn_forward.1} parent=5 // pred_check_branch
      %217 = sbr.rel (%p214) target = $region40
    $region39: #{aagnn_forward.1} parent=5 // pred_region
      %s218 = ssub.s32 %s11, 1
      %s219 = smul.u32 2, %s16
      %p220 = scmp.lt.s32.totalorder %s219, 3
      %s221 = scalar_select %p220, %s219, 3
      %s222 = smul.addr %s221, 4
      %s223 = smul.addr %s222, 8
      %s224 = scalar_lea.vmem %s0, %s223
      %p225 = pneg %p37
      %p226 = pneg %p34
      %s227 = smul.u32 2, %s16
      %p228 = scmp.lt.s32.totalorder %s227, 3
      %s229 = scalar_select %p228, %s227, 3
      %s230 = smul.addr %s229, 16
      %s231 = smul.addr %s230, 8
      %s232 = scalar_lea.vmem %s1, %s231
      %p233 = pneg %p63
      %p234 = pneg %p60
      %p235 = pneg %p84
      %p236 = pneg %p81
      %p237 = pneg %p105
      %p238 = pneg %p102
      %s239 = smul.u32 2, %s16
      %p240 = scmp.lt.s32.totalorder %s239, 3
      %s241 = scalar_select %p240, %s239, 3
      %s242 = smul.addr %s241, 16
      %s243 = smul.addr %s242, 8
      %s244 = scalar_lea.vmem %s4, %s243
      %p245 = pneg %p131
      %p246 = pneg %p128
      %p247 = pneg %p157
      %p248 = pneg %p154
      %s249 = smul.u32 2, %s16
      %p250 = scmp.lt.s32.totalorder %s249, 3
      %s251 = scalar_select %p250, %s249, 3
      %s252 = smul.addr %s251, 16
      %s253 = smul.addr %s252, 8
      %s254 = scalar_lea.vmem %s5, %s253
      %s255 = smul.u32 2, %s16
      %p256 = scmp.lt.s32.totalorder %s255, 3
      %s257 = scalar_select %p256, %s255, 3
      %s258 = smul.addr %s257, 4
      %s259 = smul.addr %s258, 8
      %s260 = scalar_lea.vmem %s0, %s259
      %s261 = smul.u32 2, %s16
      %s262 = smul.u32 2, %s16
      %p263 = scmp.lt.s32.totalorder %s262, 3
      %s264 = scalar_select %p263, %s262, 3
      %s265 = smul.addr %s264, 16
      %s266 = smul.addr %s265, 8
      %s267 = scalar_lea.vmem %s1, %s266
      %s268 = smul.u32 2, %s16
      %s269 = smul.u32 2, %s16
      %p270 = scmp.lt.s32.totalorder %s269, 3
      %s271 = scalar_select %p270, %s269, 3
      %s272 = smul.addr %s271, 16
      %s273 = smul.addr %s272, 8
      %s274 = scalar_lea.vmem %s4, %s273
      %s275 = smul.u32 2, %s16
      %s276 = smul.u32 2, %s16
      %p277 = scmp.lt.s32.totalorder %s276, 3
      %s278 = scalar_select %p277, %s276, 3
      %s279 = smul.addr %s278, 16
      %s280 = smul.addr %s279, 8
      %s281 = scalar_lea.vmem %s5, %s280
      %s282 = smul.u32 2, %s16
      %v284 = vld [vmem:[%s267] sm:$0xff]
      %v285 = vld [vmem:[%s267 + $0x8] sm:$0xff]
      %v286 = vld [vmem:[%s267 + $0x10] sm:$0xff]
      %v287 = vld [vmem:[%s267 + $0x18] sm:$0xff]
      %v288 = vld [vmem:[%s267 + $0x20] sm:$0xff]
      %v289 = vld [vmem:[%s267 + $0x28] sm:$0xff]
      %v290 = vld [vmem:[%s267 + $0x30] sm:$0xff]
      %v291 = vld [vmem:[%s267 + $0x38] sm:$0xff]
      %v292 = vld [vmem:[%s267 + $0x40] sm:$0xff]
      %v293 = vld [vmem:[%s267 + $0x48] sm:$0xff]
      %v294 = vld [vmem:[%s267 + $0x50] sm:$0xff]
      %v295 = vld [vmem:[%s267 + $0x58] sm:$0xff]
      %v296 = vld [vmem:[%s267 + $0x60] sm:$0xff]
      %v297 = vld [vmem:[%s267 + $0x68] sm:$0xff]
      %v298 = vld [vmem:[%s267 + $0x70] sm:$0xff]
      %v299 = vld [vmem:[%s267 + $0x78] sm:$0xff]
      %v300 = vld [vmem:[%s267 + $0x80] sm:$0xff]
      %v301 = vld [vmem:[%s267 + $0x88] sm:$0xff]
      %v302 = vld [vmem:[%s267 + $0x90] sm:$0xff]
      %v303 = vld [vmem:[%s267 + $0x98] sm:$0xff]
      %v304 = vld [vmem:[%s267 + $0xa0] sm:$0xff]
      %v305 = vld [vmem:[%s267 + $0xa8] sm:$0xff]
      %v306 = vld [vmem:[%s267 + $0xb0] sm:$0xff]
      %v307 = vld [vmem:[%s267 + $0xb8] sm:$0xff]
      %v308 = vld [vmem:[%s267 + $0xc0] sm:$0xff]
      %v309 = vld [vmem:[%s267 + $0xc8] sm:$0xff]
      %v310 = vld [vmem:[%s267 + $0xd0] sm:$0xff]
      %v311 = vld [vmem:[%s267 + $0xd8] sm:$0xff]
      %v312 = vld [vmem:[%s267 + $0xe0] sm:$0xff]
      %v313 = vld [vmem:[%s267 + $0xe8] sm:$0xff]
      %v314 = vld [vmem:[%s267 + $0xf0] sm:$0xff]
      %v315 = vld [vmem:[%s267 + $0xf8] sm:$0xff]
      %v316 = vld [vmem:[%s2] sm:$0xff]
      %v317 = vld [vmem:[%s2 + $0x8] sm:$0xff]
      %v318 = vld [vmem:[%s2 + $0x10] sm:$0xff]
      %v319 = vld [vmem:[%s2 + $0x18] sm:$0xff]
      %v320 = vld [vmem:[%s2 + $0x20] sm:$0xff]
      %v321 = vld [vmem:[%s2 + $0x28] sm:$0xff]
      %v322 = vld [vmem:[%s2 + $0x30] sm:$0xff]
      %v323 = vld [vmem:[%s2 + $0x38] sm:$0xff]
      %v324 = vld [vmem:[%s3] sm:$0x1]
      %v326 = vlaneseq
      %v327 = vshrl.u32 %v326, 7
      %v328 = vsub.s32 0, %v327
      %v329 = vrot.slane %v324, %v328
      %vm331 = vcmask 523264
      %v333 = vsel %vm331, %v284, 0
      %v336 = vsel %vm331, %v285, 0
      %v339 = vsel %vm331, %v286, 0
      %v342 = vsel %vm331, %v287, 0
      %v345 = vsel %vm331, %v288, 0
      %v348 = vsel %vm331, %v289, 0
      %v351 = vsel %vm331, %v290, 0
      %v354 = vsel %vm331, %v291, 0
      %v357 = vsel %vm331, %v292, 0
      %v360 = vsel %vm331, %v293, 0
      %v363 = vsel %vm331, %v294, 0
      %v366 = vsel %vm331, %v295, 0
      %v369 = vsel %vm331, %v296, 0
      %v372 = vsel %vm331, %v297, 0
      %v375 = vsel %vm331, %v298, 0
      %v378 = vsel %vm331, %v299, 0
      %v381 = vsel %vm331, %v300, 0
      %v384 = vsel %vm331, %v301, 0
      %v387 = vsel %vm331, %v302, 0
      %v390 = vsel %vm331, %v303, 0
      %v393 = vsel %vm331, %v304, 0
      %v396 = vsel %vm331, %v305, 0
      %v399 = vsel %vm331, %v306, 0
      %v402 = vsel %vm331, %v307, 0
      %v405 = vsel %vm331, %v308, 0
      %v408 = vsel %vm331, %v309, 0
      %v411 = vsel %vm331, %v310, 0
      %v414 = vsel %vm331, %v311, 0
      %v417 = vsel %vm331, %v312, 0
      %v420 = vsel %vm331, %v313, 0
      %v423 = vsel %vm331, %v314, 0
      %v426 = vsel %vm331, %v315, 0
      %428 = vmatprep.subr.mxu0 0.0
      %429 = vmatpush1.msra.mxu0 %v316
      %430 = vmatprep.subr.mxu0 0.0
      %431 = vmatpush1.msra.mxu0 %v317
      %432 = vmatprep.subr.mxu0 0.0
      %433 = vmatpush1.msra.mxu0 %v318
      %434 = vmatprep.subr.mxu0 0.0
      %435 = vmatpush1.msra.mxu0 %v319
      %436 = vmatprep.subr.mxu0 0.0
      %437 = vmatpush1.msra.mxu0 %v320
      %438 = vmatprep.subr.mxu0 0.0
      %439 = vmatpush1.msra.mxu0 %v321
      %440 = vmatprep.subr.mxu0 0.0
      %441 = vmatpush1.msra.mxu0 %v322
      %442 = vmatprep.subr.mxu0 0.0
      %443 = vmatpush1.msra.mxu0 %v323
      %444 = vmatprep.subr.mxu0 0.0
      %445 = vmatpush1.msra.mxu0 0.0
      %446 = vmatprep.subr.mxu0 0.0
      %447 = vmatpush1.msra.mxu0 0.0
      %448 = vmatprep.subr.mxu0 0.0
      %449 = vmatpush1.msra.mxu0 0.0
      %450 = vmatprep.subr.mxu0 0.0
      %451 = vmatpush1.msra.mxu0 0.0
      %452 = vmatprep.subr.mxu0 0.0
      %453 = vmatpush1.msra.mxu0 0.0
      %454 = vmatprep.subr.mxu0 0.0
      %455 = vmatpush1.msra.mxu0 0.0
      %456 = vmatprep.subr.mxu0 0.0
      %457 = vmatpush1.msra.mxu0 0.0
      %458 = vmatprep.subr.mxu0 0.0
      %459 = vmatpush1.msra.mxu0 0.0
      %460 = vmatprep.subr.mxu0 0.0
      %461 = vmatpush1.msra.mxu0 0.0
      %462 = vmatprep.subr.mxu0 0.0
      %463 = vmatpush1.msra.mxu0 0.0
      %464 = vmatprep.subr.mxu0 0.0
      %465 = vmatpush1.msra.mxu0 0.0
      %466 = vmatprep.subr.mxu0 0.0
      %467 = vmatpush1.msra.mxu0 0.0
      %468 = vmatprep.subr.mxu0 0.0
      %469 = vmatpush1.msra.mxu0 0.0
      %470 = vmatprep.subr.mxu0 0.0
      %471 = vmatpush1.msra.mxu0 0.0
      %472 = vmatprep.subr.mxu0 0.0
      %473 = vmatpush1.msra.mxu0 0.0
      %474 = vmatprep.subr.mxu0 0.0
      %475 = vmatpush1.msra.mxu0 0.0
      %476 = vmatprep.subr.mxu0 0.0
      %477 = vmatpush1.msra.mxu0 0.0
      %478 = vmatprep.subr.mxu0 0.0
      %479 = vmatpush1.msra.mxu0 0.0
      %480 = vmatprep.subr.mxu0 0.0
      %481 = vmatpush1.msra.mxu0 0.0
      %482 = vmatprep.subr.mxu0 0.0
      %483 = vmatpush1.msra.mxu0 0.0
      %484 = vmatprep.subr.mxu0 0.0
      %485 = vmatpush1.msra.mxu0 0.0
      %486 = vmatprep.subr.mxu0 0.0
      %487 = vmatpush1.msra.mxu0 0.0
      %488 = vmatprep.subr.mxu0 0.0
      %489 = vmatpush1.msra.mxu0 0.0
      %490 = vmatprep.subr.mxu0 0.0
      %491 = vmatpush1.msra.mxu0 0.0
      %492 = vmatprep.mubr.f32.mxu0 0.0
      %493 = vmatmul.mubr.f32.gmra.mrb[0].mxu0 %v333
      %v494 = vpop.f32.mrb[0].mxu0
      %v495 = vadd.f32 %v329, %v494
      %v496 = vpop.f32.mrb[0].mxu0
      %497 = vmatprep.mubr.f32.mxu0 0.0
      %498 = vmatmul.mubr.f32.gmra.mrb[0].mxu0 %v336
      %v499 = vpop.f32.mrb[0].mxu0
      %v500 = vadd.f32 %v329, %v499
      %v501 = vpop.f32.mrb[0].mxu0
      %502 = vmatprep.mubr.f32.mxu0 0.0
      %503 = vmatmul.mubr.f32.gmra.mrb[0].mxu0 %v339
      %v504 = vpop.f32.mrb[0].mxu0
      %v505 = vadd.f32 %v329, %v504
      %v506 = vpop.f32.mrb[0].mxu0
      %507 = vmatprep.mubr.f32.mxu0 0.0
      %508 = vmatmul.mubr.f32.gmra.mrb[0].mxu0 %v342
      %v509 = vpop.f32.mrb[0].mxu0
      %v510 = vadd.f32 %v329, %v509
      %v511 = vpop.f32.mrb[0].mxu0
      %512 = vmatprep.mubr.f32.mxu0 0.0
      %513 = vmatmul.mubr.f32.gmra.mrb[0].mxu0 %v345
      %v514 = vpop.f32.mrb[0].mxu0
      %v515 = vadd.f32 %v329, %v514
      %v516 = vpop.f32.mrb[0].mxu0
      %517 = vmatprep.mubr.f32.mxu0 0.0
      %518 = vmatmul.mubr.f32.gmra.mrb[0].mxu0 %v348
      %v519 = vpop.f32.mrb[0].mxu0
      %v520 = vadd.f32 %v329, %v519
      %v521 = vpop.f32.mrb[0].mxu0
      %522 = vmatprep.mubr.f32.mxu0 0.0
      %523 = vmatmul.mubr.f32.gmra.mrb[0].mxu0 %v351
      %v524 = vpop.f32.mrb[0].mxu0
      %v525 = vadd.f32 %v329, %v524
      %v526 = vpop.f32.mrb[0].mxu0
      %527 = vmatprep.mubr.f32.mxu0 0.0
      %528 = vmatmul.mubr.f32.gmra.mrb[0].mxu0 %v354
      %v529 = vpop.f32.mrb[0].mxu0
      %v530 = vadd.f32 %v329, %v529
      %v531 = vpop.f32.mrb[0].mxu0
      %532 = vmatprep.mubr.f32.mxu0 0.0
      %533 = vmatmul.mubr.f32.gmra.mrb[0].mxu0 %v357
      %v534 = vpop.f32.mrb[0].mxu0
      %v535 = vadd.f32 %v329, %v534
      %v536 = vpop.f32.mrb[0].mxu0
      %537 = vmatprep.mubr.f32.mxu0 0.0
      %538 = vmatmul.mubr.f32.gmra.mrb[0].mxu0 %v360
      %v539 = vpop.f32.mrb[0].mxu0
      %v540 = vadd.f32 %v329, %v539
      %v541 = vpop.f32.mrb[0].mxu0
      %542 = vmatprep.mubr.f32.mxu0 0.0
      %543 = vmatmul.mubr.f32.gmra.mrb[0].mxu0 %v363
      %v544 = vpop.f32.mrb[0].mxu0
      %v545 = vadd.f32 %v329, %v544
      %v546 = vpop.f32.mrb[0].mxu0
      %547 = vmatprep.mubr.f32.mxu0 0.0
      %548 = vmatmul.mubr.f32.gmra.mrb[0].mxu0 %v366
      %v549 = vpop.f32.mrb[0].mxu0
      %v550 = vadd.f32 %v329, %v549
      %v551 = vpop.f32.mrb[0].mxu0
      %552 = vmatprep.mubr.f32.mxu0 0.0
      %553 = vmatmul.mubr.f32.gmra.mrb[0].mxu0 %v369
      %v554 = vpop.f32.mrb[0].mxu0
      %v555 = vadd.f32 %v329, %v554
      %v556 = vpop.f32.mrb[0].mxu0
      %557 = vmatprep.mubr.f32.mxu0 0.0
      %558 = vmatmul.mubr.f32.gmra.mrb[0].mxu0 %v372
      %v559 = vpop.f32.mrb[0].mxu0
      %v560 = vadd.f32 %v329, %v559
      %v561 = vpop.f32.mrb[0].mxu0
      %562 = vmatprep.mubr.f32.mxu0 0.0
      %563 = vmatmul.mubr.f32.gmra.mrb[0].mxu0 %v375
      %v564 = vpop.f32.mrb[0].mxu0
      %v565 = vadd.f32 %v329, %v564
      %v566 = vpop.f32.mrb[0].mxu0
      %567 = vmatprep.mubr.f32.mxu0 0.0
      %568 = vmatmul.mubr.f32.gmra.mrb[0].mxu0 %v378
      %v569 = vpop.f32.mrb[0].mxu0
      %v570 = vadd.f32 %v329, %v569
      %v571 = vpop.f32.mrb[0].mxu0
      %572 = vmatprep.mubr.f32.mxu0 0.0
      %573 = vmatmul.mubr.f32.gmra.mrb[0].mxu0 %v381
      %v574 = vpop.f32.mrb[0].mxu0
      %v575 = vadd.f32 %v329, %v574
      %v576 = vpop.f32.mrb[0].mxu0
      %577 = vmatprep.mubr.f32.mxu0 0.0
      %578 = vmatmul.mubr.f32.gmra.mrb[0].mxu0 %v384
      %v579 = vpop.f32.mrb[0].mxu0
      %v580 = vadd.f32 %v329, %v579
      %v581 = vpop.f32.mrb[0].mxu0
      %582 = vmatprep.mubr.f32.mxu0 0.0
      %583 = vmatmul.mubr.f32.gmra.mrb[0].mxu0 %v387
      %v584 = vpop.f32.mrb[0].mxu0
      %v585 = vadd.f32 %v329, %v584
      %v586 = vpop.f32.mrb[0].mxu0
      %587 = vmatprep.mubr.f32.mxu0 0.0
      %588 = vmatmul.mubr.f32.gmra.mrb[0].mxu0 %v390
      %v589 = vpop.f32.mrb[0].mxu0
      %v590 = vadd.f32 %v329, %v589
      %v591 = vpop.f32.mrb[0].mxu0
      %592 = vmatprep.mubr.f32.mxu0 0.0
      %593 = vmatmul.mubr.f32.gmra.mrb[0].mxu0 %v393
      %v594 = vpop.f32.mrb[0].mxu0
      %v595 = vadd.f32 %v329, %v594
      %v596 = vpop.f32.mrb[0].mxu0
      %597 = vmatprep.mubr.f32.mxu0 0.0
      %598 = vmatmul.mubr.f32.gmra.mrb[0].mxu0 %v396
      %v599 = vpop.f32.mrb[0].mxu0
      %v600 = vadd.f32 %v329, %v599
      %v601 = vpop.f32.mrb[0].mxu0
      %602 = vmatprep.mubr.f32.mxu0 0.0
      %603 = vmatmul.mubr.f32.gmra.mrb[0].mxu0 %v399
      %v604 = vpop.f32.mrb[0].mxu0
      %v605 = vadd.f32 %v329, %v604
      %v606 = vpop.f32.mrb[0].mxu0
      %607 = vmatprep.mubr.f32.mxu0 0.0
      %608 = vmatmul.mubr.f32.gmra.mrb[0].mxu0 %v402
      %v609 = vpop.f32.mrb[0].mxu0
      %v610 = vadd.f32 %v329, %v609
      %v611 = vpop.f32.mrb[0].mxu0
      %612 = vmatprep.mubr.f32.mxu0 0.0
      %613 = vmatmul.mubr.f32.gmra.mrb[0].mxu0 %v405
      %v614 = vpop.f32.mrb[0].mxu0
      %v615 = vadd.f32 %v329, %v614
      %v616 = vpop.f32.mrb[0].mxu0
      %617 = vmatprep.mubr.f32.mxu0 0.0
      %618 = vmatmul.mubr.f32.gmra.mrb[0].mxu0 %v408
      %v619 = vpop.f32.mrb[0].mxu0
      %v620 = vadd.f32 %v329, %v619
      %v621 = vpop.f32.mrb[0].mxu0
      %622 = vmatprep.mubr.f32.mxu0 0.0
      %623 = vmatmul.mubr.f32.gmra.mrb[0].mxu0 %v411
      %v624 = vpop.f32.mrb[0].mxu0
      %v625 = vadd.f32 %v329, %v624
      %v626 = vpop.f32.mrb[0].mxu0
      %627 = vmatprep.mubr.f32.mxu0 0.0
      %628 = vmatmul.mubr.f32.gmra.mrb[0].mxu0 %v414
      %v629 = vpop.f32.mrb[0].mxu0
      %v630 = vadd.f32 %v329, %v629
      %v631 = vpop.f32.mrb[0].mxu0
      %632 = vmatprep.mubr.f32.mxu0 0.0
      %633 = vmatmul.mubr.f32.gmra.mrb[0].mxu0 %v417
      %v634 = vpop.f32.mrb[0].mxu0
      %v635 = vadd.f32 %v329, %v634
      %v636 = vpop.f32.mrb[0].mxu0
      %637 = vmatprep.mubr.f32.mxu0 0.0
      %638 = vmatmul.mubr.f32.gmra.mrb[0].mxu0 %v420
      %v639 = vpop.f32.mrb[0].mxu0
      %v640 = vadd.f32 %v329, %v639
      %v641 = vpop.f32.mrb[0].mxu0
      %642 = vmatprep.mubr.f32.mxu0 0.0
      %643 = vmatmul.mubr.f32.gmra.mrb[0].mxu0 %v423
      %v644 = vpop.f32.mrb[0].mxu0
      %v645 = vadd.f32 %v329, %v644
      %v646 = vpop.f32.mrb[0].mxu0
      %647 = vmatprep.mubr.f32.mxu0 0.0
      %648 = vmatmul.mubr.f32.gmra.mrb[0].mxu0 %v426
      %v649 = vpop.f32.mrb[0].mxu0
      %v650 = vadd.f32 %v329, %v649
      %v651 = vpop.f32.mrb[0].mxu0
      %652 = vdwg.mxu0
      %v653 = vld [vmem:[%s260] sm:$0xff]
      %v654 = vld [vmem:[%s260 + $0x8] sm:$0xff]
      %v655 = vld [vmem:[%s260 + $0x10] sm:$0xff]
      %v656 = vld [vmem:[%s260 + $0x18] sm:$0xff]
      %v657 = vld [vmem:[%s260 + $0x20] sm:$0xff]
      %v658 = vld [vmem:[%s260 + $0x28] sm:$0xff]
      %v659 = vld [vmem:[%s260 + $0x30] sm:$0xff]
      %v660 = vld [vmem:[%s260 + $0x38] sm:$0xff]
      %v661 = vunpack.c.0.s8 %v653
      %v662 = vunpack.c.1.s8 %v653
      %v663 = vunpack.c.2.s8 %v653
      %v664 = vunpack.c.3.s8 %v653
      %v665 = vunpack.c.0.s8 %v654
      %v666 = vunpack.c.1.s8 %v654
      %v667 = vunpack.c.2.s8 %v654
      %v668 = vunpack.c.3.s8 %v654
      %v669 = vunpack.c.0.s8 %v655
      %v670 = vunpack.c.1.s8 %v655
      %v671 = vunpack.c.2.s8 %v655
      %v672 = vunpack.c.3.s8 %v655
      %v673 = vunpack.c.0.s8 %v656
      %v674 = vunpack.c.1.s8 %v656
      %v675 = vunpack.c.2.s8 %v656
      %v676 = vunpack.c.3.s8 %v656
      %v677 = vunpack.c.0.s8 %v657
      %v678 = vunpack.c.1.s8 %v657
      %v679 = vunpack.c.2.s8 %v657
      %v680 = vunpack.c.3.s8 %v657
      %v681 = vunpack.c.0.s8 %v658
      %v682 = vunpack.c.1.s8 %v658
      %v683 = vunpack.c.2.s8 %v658
      %v684 = vunpack.c.3.s8 %v658
      %v685 = vunpack.c.0.s8 %v659
      %v686 = vunpack.c.1.s8 %v659
      %v687 = vunpack.c.2.s8 %v659
      %v688 = vunpack.c.3.s8 %v659
      %v689 = vunpack.c.0.s8 %v660
      %v690 = vunpack.c.1.s8 %v660
      %v691 = vunpack.c.2.s8 %v660
      %v692 = vunpack.c.3.s8 %v660
      %v693 = vcvt.s32.f32 %v661
      %v694 = vcvt.s32.f32 %v662
      %v695 = vcvt.s32.f32 %v663
      %v696 = vcvt.s32.f32 %v664
      %v697 = vcvt.s32.f32 %v665
      %v698 = vcvt.s32.f32 %v666
      %v699 = vcvt.s32.f32 %v667
      %v700 = vcvt.s32.f32 %v668
      %v701 = vcvt.s32.f32 %v669
      %v702 = vcvt.s32.f32 %v670
      %v703 = vcvt.s32.f32 %v671
      %v704 = vcvt.s32.f32 %v672
      %v705 = vcvt.s32.f32 %v673
      %v706 = vcvt.s32.f32 %v674
      %v707 = vcvt.s32.f32 %v675
      %v708 = vcvt.s32.f32 %v676
      %v709 = vcvt.s32.f32 %v677
      %v710 = vcvt.s32.f32 %v678
      %v711 = vcvt.s32.f32 %v679
      %v712 = vcvt.s32.f32 %v680
      %v713 = vcvt.s32.f32 %v681
      %v714 = vcvt.s32.f32 %v682
      %v715 = vcvt.s32.f32 %v683
      %v716 = vcvt.s32.f32 %v684
      %v717 = vcvt.s32.f32 %v685
      %v718 = vcvt.s32.f32 %v686
      %v719 = vcvt.s32.f32 %v687
      %v720 = vcvt.s32.f32 %v688
      %v721 = vcvt.s32.f32 %v689
      %v722 = vcvt.s32.f32 %v690
      %v723 = vcvt.s32.f32 %v691
      %v724 = vcvt.s32.f32 %v692
      %v725 = vlaneseq
      %v726 = vshrl.u32 %v725, 7
      %v727 = vadd.s32 %v726, 8
      %v728 = vadd.s32 %v726, 16
      %v729 = vadd.s32 %v726, 24
      %v730 = vadd.s32 %v726, 32
      %v731 = vadd.s32 %v726, 40
      %v732 = vadd.s32 %v726, 48
      %v733 = vadd.s32 %v726, 56
      %v734 = vadd.s32 %v726, 64
      %v735 = vadd.s32 %v726, 72
      %v736 = vadd.s32 %v726, 80
      %v737 = vadd.s32 %v726, 88
      %v738 = vadd.s32 %v726, 96
      %v739 = vadd.s32 %v726, 104
      %v740 = vadd.s32 %v726, 112
      %v741 = vadd.s32 %v726, 120
      %v742 = vlaneseq
      %v743 = vand.u32 %v742, 127
      %vm744 = vcmp.eq.s32.totalorder %v726, %v743
      %vm745 = vcmp.eq.s32.totalorder %v727, %v743
      %vm746 = vcmp.eq.s32.totalorder %v728, %v743
      %vm747 = vcmp.eq.s32.totalorder %v729, %v743
      %vm748 = vcmp.eq.s32.totalorder %v730, %v743
      %vm749 = vcmp.eq.s32.totalorder %v731, %v743
      %vm750 = vcmp.eq.s32.totalorder %v732, %v743
      %vm751 = vcmp.eq.s32.totalorder %v733, %v743
      %vm752 = vcmp.eq.s32.totalorder %v734, %v743
      %vm753 = vcmp.eq.s32.totalorder %v735, %v743
      %vm754 = vcmp.eq.s32.totalorder %v736, %v743
      %vm755 = vcmp.eq.s32.totalorder %v737, %v743
      %vm756 = vcmp.eq.s32.totalorder %v738, %v743
      %vm757 = vcmp.eq.s32.totalorder %v739, %v743
      %vm758 = vcmp.eq.s32.totalorder %v740, %v743
      %vm759 = vcmp.eq.s32.totalorder %v741, %v743
      %792 = vrot.lane.b32.xlu0 %v495, 127
      %v793 = vpop.permute.xlu0 %792
      %794 = vrot.lane.b32.xlu0 %v500, 127
      %v795 = vpop.permute.xlu0 %794
      %796 = vrot.lane.b32.xlu0 %v505, 127
      %v797 = vpop.permute.xlu0 %796
      %798 = vrot.lane.b32.xlu0 %v510, 127
      %v799 = vpop.permute.xlu0 %798
      %800 = vrot.lane.b32.xlu0 %v515, 127
      %v801 = vpop.permute.xlu0 %800
      %802 = vrot.lane.b32.xlu0 %v520, 127
      %v803 = vpop.permute.xlu0 %802
      %804 = vrot.lane.b32.xlu0 %v525, 127
      %v805 = vpop.permute.xlu0 %804
      %806 = vrot.lane.b32.xlu0 %v530, 127
      %v807 = vpop.permute.xlu0 %806
      %808 = vrot.lane.b32.xlu0 %v535, 127
      %v809 = vpop.permute.xlu0 %808
      %810 = vrot.lane.b32.xlu0 %v540, 127
      %v811 = vpop.permute.xlu0 %810
      %812 = vrot.lane.b32.xlu0 %v545, 127
      %v813 = vpop.permute.xlu0 %812
      %814 = vrot.lane.b32.xlu0 %v550, 127
      %v815 = vpop.permute.xlu0 %814
      %816 = vrot.lane.b32.xlu0 %v555, 127
      %v817 = vpop.permute.xlu0 %816
      %818 = vrot.lane.b32.xlu0 %v560, 127
      %v819 = vpop.permute.xlu0 %818
      %820 = vrot.lane.b32.xlu0 %v565, 127
      %v821 = vpop.permute.xlu0 %820
      %822 = vrot.lane.b32.xlu0 %v570, 127
      %v823 = vpop.permute.xlu0 %822
      %824 = vrot.lane.b32.xlu0 %v575, 127
      %v825 = vpop.permute.xlu0 %824
      %826 = vrot.lane.b32.xlu0 %v580, 127
      %v827 = vpop.permute.xlu0 %826
      %828 = vrot.lane.b32.xlu0 %v585, 127
      %v829 = vpop.permute.xlu0 %828
      %830 = vrot.lane.b32.xlu0 %v590, 127
      %v831 = vpop.permute.xlu0 %830
      %832 = vrot.lane.b32.xlu0 %v595, 127
      %v833 = vpop.permute.xlu0 %832
      %834 = vrot.lane.b32.xlu0 %v600, 127
      %v835 = vpop.permute.xlu0 %834
      %836 = vrot.lane.b32.xlu0 %v605, 127
      %v837 = vpop.permute.xlu0 %836
      %838 = vrot.lane.b32.xlu0 %v610, 127
      %v839 = vpop.permute.xlu0 %838
      %840 = vrot.lane.b32.xlu0 %v615, 127
      %v841 = vpop.permute.xlu0 %840
      %842 = vrot.lane.b32.xlu0 %v620, 127
      %v843 = vpop.permute.xlu0 %842
      %844 = vrot.lane.b32.xlu0 %v625, 127
      %v845 = vpop.permute.xlu0 %844
      %846 = vrot.lane.b32.xlu0 %v630, 127
      %v847 = vpop.permute.xlu0 %846
      %848 = vrot.lane.b32.xlu0 %v635, 127
      %v849 = vpop.permute.xlu0 %848
      %850 = vrot.lane.b32.xlu0 %v640, 127
      %v851 = vpop.permute.xlu0 %850
      %852 = vrot.lane.b32.xlu0 %v645, 127
      %v853 = vpop.permute.xlu0 %852
      %854 = vrot.lane.b32.xlu0 %v650, 127
      %v855 = vpop.permute.xlu0 %854
      %v888 = vadd.f32 %v495, %v793
      %v889 = vadd.f32 %v500, %v795
      %v890 = vadd.f32 %v505, %v797
      %v891 = vadd.f32 %v510, %v799
      %v892 = vadd.f32 %v515, %v801
      %v893 = vadd.f32 %v520, %v803
      %v894 = vadd.f32 %v525, %v805
      %v895 = vadd.f32 %v530, %v807
      %v896 = vadd.f32 %v535, %v809
      %v897 = vadd.f32 %v540, %v811
      %v898 = vadd.f32 %v545, %v813
      %v899 = vadd.f32 %v550, %v815
      %v900 = vadd.f32 %v555, %v817
      %v901 = vadd.f32 %v560, %v819
      %v902 = vadd.f32 %v565, %v821
      %v903 = vadd.f32 %v570, %v823
      %v904 = vadd.f32 %v575, %v825
      %v905 = vadd.f32 %v580, %v827
      %v906 = vadd.f32 %v585, %v829
      %v907 = vadd.f32 %v590, %v831
      %v908 = vadd.f32 %v595, %v833
      %v909 = vadd.f32 %v600, %v835
      %v910 = vadd.f32 %v605, %v837
      %v911 = vadd.f32 %v610, %v839
      %v912 = vadd.f32 %v615, %v841
      %v913 = vadd.f32 %v620, %v843
      %v914 = vadd.f32 %v625, %v845
      %v915 = vadd.f32 %v630, %v847
      %v916 = vadd.f32 %v635, %v849
      %v917 = vadd.f32 %v640, %v851
      %v918 = vadd.f32 %v645, %v853
      %v919 = vadd.f32 %v650, %v855
      %v920 = vsel %vm744, 1, 0
      %v921 = vsel %vm745, 1, 0
      %v922 = vsel %vm746, 1, 0
      %v923 = vsel %vm747, 1, 0
      %v924 = vsel %vm748, 1, 0
      %v925 = vsel %vm749, 1, 0
      %v926 = vsel %vm750, 1, 0
      %v927 = vsel %vm751, 1, 0
      %v928 = vsel %vm752, 1, 0
      %v929 = vsel %vm753, 1, 0
      %v930 = vsel %vm754, 1, 0
      %v931 = vsel %vm755, 1, 0
      %v932 = vsel %vm756, 1, 0
      %v933 = vsel %vm757, 1, 0
      %v934 = vsel %vm758, 1, 0
      %v935 = vsel %vm759, 1, 0
      %vm936 = vcmp.eq.s32.totalorder %v920, 1
      %vm937 = vcmp.eq.s32.totalorder %v921, 1
      %vm938 = vcmp.eq.s32.totalorder %v922, 1
      %vm939 = vcmp.eq.s32.totalorder %v923, 1
      %vm940 = vcmp.eq.s32.totalorder %v924, 1
      %vm941 = vcmp.eq.s32.totalorder %v925, 1
      %vm942 = vcmp.eq.s32.totalorder %v926, 1
      %vm943 = vcmp.eq.s32.totalorder %v927, 1
      %vm944 = vcmp.eq.s32.totalorder %v928, 1
      %vm945 = vcmp.eq.s32.totalorder %v929, 1
      %vm946 = vcmp.eq.s32.totalorder %v930, 1
      %vm947 = vcmp.eq.s32.totalorder %v931, 1
      %vm948 = vcmp.eq.s32.totalorder %v932, 1
      %vm949 = vcmp.eq.s32.totalorder %v933, 1
      %vm950 = vcmp.eq.s32.totalorder %v934, 1
      %vm951 = vcmp.eq.s32.totalorder %v935, 1
      %953 = vset.pattern.permute.xlu0 126
      %954 = vperm.xlu0 %953, %v888
      %v955 = vpop.permute.xlu0 %954
      %958 = vset.pattern.permute.xlu0 126
      %959 = vperm.xlu0 %958, %v889
      %v960 = vpop.permute.xlu0 %959
      %963 = vset.pattern.permute.xlu0 126
      %964 = vperm.xlu0 %963, %v890
      %v965 = vpop.permute.xlu0 %964
      %968 = vset.pattern.permute.xlu0 126
      %969 = vperm.xlu0 %968, %v891
      %v970 = vpop.permute.xlu0 %969
      %973 = vset.pattern.permute.xlu0 126
      %974 = vperm.xlu0 %973, %v892
      %v975 = vpop.permute.xlu0 %974
      %978 = vset.pattern.permute.xlu0 126
      %979 = vperm.xlu0 %978, %v893
      %v980 = vpop.permute.xlu0 %979
      %983 = vset.pattern.permute.xlu0 126
      %984 = vperm.xlu0 %983, %v894
      %v985 = vpop.permute.xlu0 %984
      %988 = vset.pattern.permute.xlu0 126
      %989 = vperm.xlu0 %988, %v895
      %v990 = vpop.permute.xlu0 %989
      %993 = vset.pattern.permute.xlu0 126
      %994 = vperm.xlu0 %993, %v896
      %v995 = vpop.permute.xlu0 %994
      %998 = vset.pattern.permute.xlu0 126
      %999 = vperm.xlu0 %998, %v897
      %v1000 = vpop.permute.xlu0 %999
      %1003 = vset.pattern.permute.xlu0 126
      %1004 = vperm.xlu0 %1003, %v898
      %v1005 = vpop.permute.xlu0 %1004
      %1008 = vset.pattern.permute.xlu0 126
      %1009 = vperm.xlu0 %1008, %v899
      %v1010 = vpop.permute.xlu0 %1009
      %1013 = vset.pattern.permute.xlu0 126
      %1014 = vperm.xlu0 %1013, %v900
      %v1015 = vpop.permute.xlu0 %1014
      %1018 = vset.pattern.permute.xlu0 126
      %1019 = vperm.xlu0 %1018, %v901
      %v1020 = vpop.permute.xlu0 %1019
      %1023 = vset.pattern.permute.xlu0 126
      %1024 = vperm.xlu0 %1023, %v902
      %v1025 = vpop.permute.xlu0 %1024
      %1028 = vset.pattern.permute.xlu0 126
      %1029 = vperm.xlu0 %1028, %v903
      %v1030 = vpop.permute.xlu0 %1029
      %1033 = vset.pattern.permute.xlu0 126
      %1034 = vperm.xlu0 %1033, %v904
      %v1035 = vpop.permute.xlu0 %1034
      %1038 = vset.pattern.permute.xlu0 126
      %1039 = vperm.xlu0 %1038, %v905
      %v1040 = vpop.permute.xlu0 %1039
      %1043 = vset.pattern.permute.xlu0 126
      %1044 = vperm.xlu0 %1043, %v906
      %v1045 = vpop.permute.xlu0 %1044
      %1048 = vset.pattern.permute.xlu0 126
      %1049 = vperm.xlu0 %1048, %v907
      %v1050 = vpop.permute.xlu0 %1049
      %1053 = vset.pattern.permute.xlu0 126
      %1054 = vperm.xlu0 %1053, %v908
      %v1055 = vpop.permute.xlu0 %1054
      %1058 = vset.pattern.permute.xlu0 126
      %1059 = vperm.xlu0 %1058, %v909
      %v1060 = vpop.permute.xlu0 %1059
      %1063 = vset.pattern.permute.xlu0 126
      %1064 = vperm.xlu0 %1063, %v910
      %v1065 = vpop.permute.xlu0 %1064
      %1068 = vset.pattern.permute.xlu0 126
      %1069 = vperm.xlu0 %1068, %v911
      %v1070 = vpop.permute.xlu0 %1069
      %1073 = vset.pattern.permute.xlu0 126
      %1074 = vperm.xlu0 %1073, %v912
      %v1075 = vpop.permute.xlu0 %1074
      %1078 = vset.pattern.permute.xlu0 126
      %1079 = vperm.xlu0 %1078, %v913
      %v1080 = vpop.permute.xlu0 %1079
      %1083 = vset.pattern.permute.xlu0 126
      %1084 = vperm.xlu0 %1083, %v914
      %v1085 = vpop.permute.xlu0 %1084
      %1088 = vset.pattern.permute.xlu0 126
      %1089 = vperm.xlu0 %1088, %v915
      %v1090 = vpop.permute.xlu0 %1089
      %1093 = vset.pattern.permute.xlu0 126
      %1094 = vperm.xlu0 %1093, %v916
      %v1095 = vpop.permute.xlu0 %1094
      %1098 = vset.pattern.permute.xlu0 126
      %1099 = vperm.xlu0 %1098, %v917
      %v1100 = vpop.permute.xlu0 %1099
      %1103 = vset.pattern.permute.xlu0 126
      %1104 = vperm.xlu0 %1103, %v918
      %v1105 = vpop.permute.xlu0 %1104
      %1108 = vset.pattern.permute.xlu0 126
      %1109 = vperm.xlu0 %1108, %v919
      %v1110 = vpop.permute.xlu0 %1109
      %1112 = vset.pattern.permute.xlu0 126
      %1113 = vperm.xlu0 %1112, %v495
      %v1114 = vpop.permute.xlu0 %1113
      %1116 = vset.pattern.permute.xlu0 126
      %1117 = vperm.xlu0 %1116, %v500
      %v1118 = vpop.permute.xlu0 %1117
      %1120 = vset.pattern.permute.xlu0 126
      %1121 = vperm.xlu0 %1120, %v505
      %v1122 = vpop.permute.xlu0 %1121
      %1124 = vset.pattern.permute.xlu0 126
      %1125 = vperm.xlu0 %1124, %v510
      %v1126 = vpop.permute.xlu0 %1125
      %1128 = vset.pattern.permute.xlu0 126
      %1129 = vperm.xlu0 %1128, %v515
      %v1130 = vpop.permute.xlu0 %1129
      %1132 = vset.pattern.permute.xlu0 126
      %1133 = vperm.xlu0 %1132, %v520
      %v1134 = vpop.permute.xlu0 %1133
      %1136 = vset.pattern.permute.xlu0 126
      %1137 = vperm.xlu0 %1136, %v525
      %v1138 = vpop.permute.xlu0 %1137
      %1140 = vset.pattern.permute.xlu0 126
      %1141 = vperm.xlu0 %1140, %v530
      %v1142 = vpop.permute.xlu0 %1141
      %1144 = vset.pattern.permute.xlu0 126
      %1145 = vperm.xlu0 %1144, %v535
      %v1146 = vpop.permute.xlu0 %1145
      %1148 = vset.pattern.permute.xlu0 126
      %1149 = vperm.xlu0 %1148, %v540
      %v1150 = vpop.permute.xlu0 %1149
      %1152 = vset.pattern.permute.xlu0 126
      %1153 = vperm.xlu0 %1152, %v545
      %v1154 = vpop.permute.xlu0 %1153
      %1156 = vset.pattern.permute.xlu0 126
      %1157 = vperm.xlu0 %1156, %v550
      %v1158 = vpop.permute.xlu0 %1157
      %1160 = vset.pattern.permute.xlu0 126
      %1161 = vperm.xlu0 %1160, %v555
      %v1162 = vpop.permute.xlu0 %1161
      %1164 = vset.pattern.permute.xlu0 126
      %1165 = vperm.xlu0 %1164, %v560
      %v1166 = vpop.permute.xlu0 %1165
      %1168 = vset.pattern.permute.xlu0 126
      %1169 = vperm.xlu0 %1168, %v565
      %v1170 = vpop.permute.xlu0 %1169
      %1172 = vset.pattern.permute.xlu0 126
      %1173 = vperm.xlu0 %1172, %v570
      %v1174 = vpop.permute.xlu0 %1173
      %1176 = vset.pattern.permute.xlu0 126
      %1177 = vperm.xlu0 %1176, %v575
      %v1178 = vpop.permute.xlu0 %1177
      %1180 = vset.pattern.permute.xlu0 126
      %1181 = vperm.xlu0 %1180, %v580
      %v1182 = vpop.permute.xlu0 %1181
      %1184 = vset.pattern.permute.xlu0 126
      %1185 = vperm.xlu0 %1184, %v585
      %v1186 = vpop.permute.xlu0 %1185
      %1188 = vset.pattern.permute.xlu0 126
      %1189 = vperm.xlu0 %1188, %v590
      %v1190 = vpop.permute.xlu0 %1189
      %1192 = vset.pattern.permute.xlu0 126
      %1193 = vperm.xlu0 %1192, %v595
      %v1194 = vpop.permute.xlu0 %1193
      %1196 = vset.pattern.permute.xlu0 126
      %1197 = vperm.xlu0 %1196, %v600
      %v1198 = vpop.permute.xlu0 %1197
      %1200 = vset.pattern.permute.xlu0 126
      %1201 = vperm.xlu0 %1200, %v605
      %v1202 = vpop.permute.xlu0 %1201
      %1204 = vset.pattern.permute.xlu0 126
      %1205 = vperm.xlu0 %1204, %v610
      %v1206 = vpop.permute.xlu0 %1205
      %1208 = vset.pattern.permute.xlu0 126
      %1209 = vperm.xlu0 %1208, %v615
      %v1210 = vpop.permute.xlu0 %1209
      %1212 = vset.pattern.permute.xlu0 126
      %1213 = vperm.xlu0 %1212, %v620
      %v1214 = vpop.permute.xlu0 %1213
      %1216 = vset.pattern.permute.xlu0 126
      %1217 = vperm.xlu0 %1216, %v625
      %v1218 = vpop.permute.xlu0 %1217
      %1220 = vset.pattern.permute.xlu0 126
      %1221 = vperm.xlu0 %1220, %v630
      %v1222 = vpop.permute.xlu0 %1221
      %1224 = vset.pattern.permute.xlu0 126
      %1225 = vperm.xlu0 %1224, %v635
      %v1226 = vpop.permute.xlu0 %1225
      %1228 = vset.pattern.permute.xlu0 126
      %1229 = vperm.xlu0 %1228, %v640
      %v1230 = vpop.permute.xlu0 %1229
      %1232 = vset.pattern.permute.xlu0 126
      %1233 = vperm.xlu0 %1232, %v645
      %v1234 = vpop.permute.xlu0 %1233
      %1236 = vset.pattern.permute.xlu0 126
      %1237 = vperm.xlu0 %1236, %v650
      %v1238 = vpop.permute.xlu0 %1237
      %v1240 = vsel %vm936, %v955, %v1114
      %v1241 = vsel %vm937, %v960, %v1118
      %v1242 = vsel %vm938, %v965, %v1122
      %v1243 = vsel %vm939, %v970, %v1126
      %v1244 = vsel %vm940, %v975, %v1130
      %v1245 = vsel %vm941, %v980, %v1134
      %v1246 = vsel %vm942, %v985, %v1138
      %v1247 = vsel %vm943, %v990, %v1142
      %v1248 = vsel %vm944, %v995, %v1146
      %v1249 = vsel %vm945, %v1000, %v1150
      %v1250 = vsel %vm946, %v1005, %v1154
      %v1251 = vsel %vm947, %v1010, %v1158
      %v1252 = vsel %vm948, %v1015, %v1162
      %v1253 = vsel %vm949, %v1020, %v1166
      %v1254 = vsel %vm950, %v1025, %v1170
      %v1255 = vsel %vm951, %v1030, %v1174
      %v1256 = vsel %vm936, %v1035, %v1178
      %v1257 = vsel %vm937, %v1040, %v1182
      %v1258 = vsel %vm938, %v1045, %v1186
      %v1259 = vsel %vm939, %v1050, %v1190
      %v1260 = vsel %vm940, %v1055, %v1194
      %v1261 = vsel %vm941, %v1060, %v1198
      %v1262 = vsel %vm942, %v1065, %v1202
      %v1263 = vsel %vm943, %v1070, %v1206
      %v1264 = vsel %vm944, %v1075, %v1210
      %v1265 = vsel %vm945, %v1080, %v1214
      %v1266 = vsel %vm946, %v1085, %v1218
      %v1267 = vsel %vm947, %v1090, %v1222
      %v1268 = vsel %vm948, %v1095, %v1226
      %v1269 = vsel %vm949, %v1100, %v1230
      %v1270 = vsel %vm950, %v1105, %v1234
      %v1271 = vsel %vm951, %v1110, %v1238
      %v1272 = vmul.f32 %v693, %v1240
      %v1273 = vmul.f32 %v694, %v1241
      %v1274 = vmul.f32 %v695, %v1242
      %v1275 = vmul.f32 %v696, %v1243
      %v1276 = vmul.f32 %v697, %v1244
      %v1277 = vmul.f32 %v698, %v1245
      %v1278 = vmul.f32 %v699, %v1246
      %v1279 = vmul.f32 %v700, %v1247
      %v1280 = vmul.f32 %v701, %v1248
      %v1281 = vmul.f32 %v702, %v1249
      %v1282 = vmul.f32 %v703, %v1250
      %v1283 = vmul.f32 %v704, %v1251
      %v1284 = vmul.f32 %v705, %v1252
      %v1285 = vmul.f32 %v706, %v1253
      %v1286 = vmul.f32 %v707, %v1254
      %v1287 = vmul.f32 %v708, %v1255
      %v1288 = vmul.f32 %v709, %v1256
      %v1289 = vmul.f32 %v710, %v1257
      %v1290 = vmul.f32 %v711, %v1258
      %v1291 = vmul.f32 %v712, %v1259
      %v1292 = vmul.f32 %v713, %v1260
      %v1293 = vmul.f32 %v714, %v1261
      %v1294 = vmul.f32 %v715, %v1262
      %v1295 = vmul.f32 %v716, %v1263
      %v1296 = vmul.f32 %v717, %v1264
      %v1297 = vmul.f32 %v718, %v1265
      %v1298 = vmul.f32 %v719, %v1266
      %v1299 = vmul.f32 %v720, %v1267
      %v1300 = vmul.f32 %v721, %v1268
      %v1301 = vmul.f32 %v722, %v1269
      %v1302 = vmul.f32 %v723, %v1270
      %v1303 = vmul.f32 %v724, %v1271
      %vm1304 = vcmp.ge.f32.partialorder %v1272, 0.0
      %vm1305 = vcmp.ge.f32.partialorder %v1273, 0.0
      %vm1306 = vcmp.ge.f32.partialorder %v1274, 0.0
      %vm1307 = vcmp.ge.f32.partialorder %v1275, 0.0
      %vm1308 = vcmp.ge.f32.partialorder %v1276, 0.0
      %vm1309 = vcmp.ge.f32.partialorder %v1277, 0.0
      %vm1310 = vcmp.ge.f32.partialorder %v1278, 0.0
      %vm1311 = vcmp.ge.f32.partialorder %v1279, 0.0
      %vm1312 = vcmp.ge.f32.partialorder %v1280, 0.0
      %vm1313 = vcmp.ge.f32.partialorder %v1281, 0.0
      %vm1314 = vcmp.ge.f32.partialorder %v1282, 0.0
      %vm1315 = vcmp.ge.f32.partialorder %v1283, 0.0
      %vm1316 = vcmp.ge.f32.partialorder %v1284, 0.0
      %vm1317 = vcmp.ge.f32.partialorder %v1285, 0.0
      %vm1318 = vcmp.ge.f32.partialorder %v1286, 0.0
      %vm1319 = vcmp.ge.f32.partialorder %v1287, 0.0
      %vm1320 = vcmp.ge.f32.partialorder %v1288, 0.0
      %vm1321 = vcmp.ge.f32.partialorder %v1289, 0.0
      %vm1322 = vcmp.ge.f32.partialorder %v1290, 0.0
      %vm1323 = vcmp.ge.f32.partialorder %v1291, 0.0
      %vm1324 = vcmp.ge.f32.partialorder %v1292, 0.0
      %vm1325 = vcmp.ge.f32.partialorder %v1293, 0.0
      %vm1326 = vcmp.ge.f32.partialorder %v1294, 0.0
      %vm1327 = vcmp.ge.f32.partialorder %v1295, 0.0
      %vm1328 = vcmp.ge.f32.partialorder %v1296, 0.0
      %vm1329 = vcmp.ge.f32.partialorder %v1297, 0.0
      %vm1330 = vcmp.ge.f32.partialorder %v1298, 0.0
      %vm1331 = vcmp.ge.f32.partialorder %v1299, 0.0
      %vm1332 = vcmp.ge.f32.partialorder %v1300, 0.0
      %vm1333 = vcmp.ge.f32.partialorder %v1301, 0.0
      %vm1334 = vcmp.ge.f32.partialorder %v1302, 0.0
      %vm1335 = vcmp.ge.f32.partialorder %v1303, 0.0
      %v1336 = vmul.f32 %v1272, 0.01
      %v1337 = vmul.f32 %v1273, 0.01
      %v1338 = vmul.f32 %v1274, 0.01
      %v1339 = vmul.f32 %v1275, 0.01
      %v1340 = vmul.f32 %v1276, 0.01
      %v1341 = vmul.f32 %v1277, 0.01
      %v1342 = vmul.f32 %v1278, 0.01
      %v1343 = vmul.f32 %v1279, 0.01
      %v1344 = vmul.f32 %v1280, 0.01
      %v1345 = vmul.f32 %v1281, 0.01
      %v1346 = vmul.f32 %v1282, 0.01
      %v1347 = vmul.f32 %v1283, 0.01
      %v1348 = vmul.f32 %v1284, 0.01
      %v1349 = vmul.f32 %v1285, 0.01
      %v1350 = vmul.f32 %v1286, 0.01
      %v1351 = vmul.f32 %v1287, 0.01
      %v1352 = vmul.f32 %v1288, 0.01
      %v1353 = vmul.f32 %v1289, 0.01
      %v1354 = vmul.f32 %v1290, 0.01
      %v1355 = vmul.f32 %v1291, 0.01
      %v1356 = vmul.f32 %v1292, 0.01
      %v1357 = vmul.f32 %v1293, 0.01
      %v1358 = vmul.f32 %v1294, 0.01
      %v1359 = vmul.f32 %v1295, 0.01
      %v1360 = vmul.f32 %v1296, 0.01
      %v1361 = vmul.f32 %v1297, 0.01
      %v1362 = vmul.f32 %v1298, 0.01
      %v1363 = vmul.f32 %v1299, 0.01
      %v1364 = vmul.f32 %v1300, 0.01
      %v1365 = vmul.f32 %v1301, 0.01
      %v1366 = vmul.f32 %v1302, 0.01
      %v1367 = vmul.f32 %v1303, 0.01
      %v1368 = vsel %vm1304, %v1272, %v1336
      %v1369 = vsel %vm1305, %v1273, %v1337
      %v1370 = vsel %vm1306, %v1274, %v1338
      %v1371 = vsel %vm1307, %v1275, %v1339
      %v1372 = vsel %vm1308, %v1276, %v1340
      %v1373 = vsel %vm1309, %v1277, %v1341
      %v1374 = vsel %vm1310, %v1278, %v1342
      %v1375 = vsel %vm1311, %v1279, %v1343
      %v1376 = vsel %vm1312, %v1280, %v1344
      %v1377 = vsel %vm1313, %v1281, %v1345
      %v1378 = vsel %vm1314, %v1282, %v1346
      %v1379 = vsel %vm1315, %v1283, %v1347
      %v1380 = vsel %vm1316, %v1284, %v1348
      %v1381 = vsel %vm1317, %v1285, %v1349
      %v1382 = vsel %vm1318, %v1286, %v1350
      %v1383 = vsel %vm1319, %v1287, %v1351
      %v1384 = vsel %vm1320, %v1288, %v1352
      %v1385 = vsel %vm1321, %v1289, %v1353
      %v1386 = vsel %vm1322, %v1290, %v1354
      %v1387 = vsel %vm1323, %v1291, %v1355
      %v1388 = vsel %vm1324, %v1292, %v1356
      %v1389 = vsel %vm1325, %v1293, %v1357
      %v1390 = vsel %vm1326, %v1294, %v1358
      %v1391 = vsel %vm1327, %v1295, %v1359
      %v1392 = vsel %vm1328, %v1296, %v1360
      %v1393 = vsel %vm1329, %v1297, %v1361
      %v1394 = vsel %vm1330, %v1298, %v1362
      %v1395 = vsel %vm1331, %v1299, %v1363
      %v1396 = vsel %vm1332, %v1300, %v1364
      %v1397 = vsel %vm1333, %v1301, %v1365
      %v1398 = vsel %vm1334, %v1302, %v1366
      %v1399 = vsel %vm1335, %v1303, %v1367
      %1400 = vmax.xlane.f32.xlu0 %v1368
      %v1401 = vpop.xlane.xlu0 %1400
      %1402 = vmax.xlane.f32.xlu0 %v1369
      %v1403 = vpop.xlane.xlu0 %1402
      %1404 = vmax.xlane.f32.xlu0 %v1370
      %v1405 = vpop.xlane.xlu0 %1404
      %1406 = vmax.xlane.f32.xlu0 %v1371
      %v1407 = vpop.xlane.xlu0 %1406
      %1408 = vmax.xlane.f32.xlu0 %v1372
      %v1409 = vpop.xlane.xlu0 %1408
      %1410 = vmax.xlane.f32.xlu0 %v1373
      %v1411 = vpop.xlane.xlu0 %1410
      %1412 = vmax.xlane.f32.xlu0 %v1374
      %v1413 = vpop.xlane.xlu0 %1412
      %1414 = vmax.xlane.f32.xlu0 %v1375
      %v1415 = vpop.xlane.xlu0 %1414
      %1416 = vmax.xlane.f32.xlu0 %v1376
      %v1417 = vpop.xlane.xlu0 %1416
      %1418 = vmax.xlane.f32.xlu0 %v1377
      %v1419 = vpop.xlane.xlu0 %1418
      %1420 = vmax.xlane.f32.xlu0 %v1378
      %v1421 = vpop.xlane.xlu0 %1420
      %1422 = vmax.xlane.f32.xlu0 %v1379
      %v1423 = vpop.xlane.xlu0 %1422
      %1424 = vmax.xlane.f32.xlu0 %v1380
      %v1425 = vpop.xlane.xlu0 %1424
      %1426 = vmax.xlane.f32.xlu0 %v1381
      %v1427 = vpop.xlane.xlu0 %1426
      %1428 = vmax.xlane.f32.xlu0 %v1382
      %v1429 = vpop.xlane.xlu0 %1428
      %1430 = vmax.xlane.f32.xlu0 %v1383
      %v1431 = vpop.xlane.xlu0 %1430
      %1432 = vmax.xlane.f32.xlu0 %v1384
      %v1433 = vpop.xlane.xlu0 %1432
      %1434 = vmax.xlane.f32.xlu0 %v1385
      %v1435 = vpop.xlane.xlu0 %1434
      %1436 = vmax.xlane.f32.xlu0 %v1386
      %v1437 = vpop.xlane.xlu0 %1436
      %1438 = vmax.xlane.f32.xlu0 %v1387
      %v1439 = vpop.xlane.xlu0 %1438
      %1440 = vmax.xlane.f32.xlu0 %v1388
      %v1441 = vpop.xlane.xlu0 %1440
      %1442 = vmax.xlane.f32.xlu0 %v1389
      %v1443 = vpop.xlane.xlu0 %1442
      %1444 = vmax.xlane.f32.xlu0 %v1390
      %v1445 = vpop.xlane.xlu0 %1444
      %1446 = vmax.xlane.f32.xlu0 %v1391
      %v1447 = vpop.xlane.xlu0 %1446
      %1448 = vmax.xlane.f32.xlu0 %v1392
      %v1449 = vpop.xlane.xlu0 %1448
      %1450 = vmax.xlane.f32.xlu0 %v1393
      %v1451 = vpop.xlane.xlu0 %1450
      %1452 = vmax.xlane.f32.xlu0 %v1394
      %v1453 = vpop.xlane.xlu0 %1452
      %1454 = vmax.xlane.f32.xlu0 %v1395
      %v1455 = vpop.xlane.xlu0 %1454
      %1456 = vmax.xlane.f32.xlu0 %v1396
      %v1457 = vpop.xlane.xlu0 %1456
      %1458 = vmax.xlane.f32.xlu0 %v1397
      %v1459 = vpop.xlane.xlu0 %1458
      %1460 = vmax.xlane.f32.xlu0 %v1398
      %v1461 = vpop.xlane.xlu0 %1460
      %1462 = vmax.xlane.f32.xlu0 %v1399
      %v1463 = vpop.xlane.xlu0 %1462
      %v1464 = vsub.f32 %v1368, %v1401
      %v1465 = vsub.f32 %v1369, %v1403
      %v1466 = vsub.f32 %v1370, %v1405
      %v1467 = vsub.f32 %v1371, %v1407
      %v1468 = vsub.f32 %v1372, %v1409
      %v1469 = vsub.f32 %v1373, %v1411
      %v1470 = vsub.f32 %v1374, %v1413
      %v1471 = vsub.f32 %v1375, %v1415
      %v1472 = vsub.f32 %v1376, %v1417
      %v1473 = vsub.f32 %v1377, %v1419
      %v1474 = vsub.f32 %v1378, %v1421
      %v1475 = vsub.f32 %v1379, %v1423
      %v1476 = vsub.f32 %v1380, %v1425
      %v1477 = vsub.f32 %v1381, %v1427
      %v1478 = vsub.f32 %v1382, %v1429
      %v1479 = vsub.f32 %v1383, %v1431
      %v1480 = vsub.f32 %v1384, %v1433
      %v1481 = vsub.f32 %v1385, %v1435
      %v1482 = vsub.f32 %v1386, %v1437
      %v1483 = vsub.f32 %v1387, %v1439
      %v1484 = vsub.f32 %v1388, %v1441
      %v1485 = vsub.f32 %v1389, %v1443
      %v1486 = vsub.f32 %v1390, %v1445
      %v1487 = vsub.f32 %v1391, %v1447
      %v1488 = vsub.f32 %v1392, %v1449
      %v1489 = vsub.f32 %v1393, %v1451
      %v1490 = vsub.f32 %v1394, %v1453
      %v1491 = vsub.f32 %v1395, %v1455
      %v1492 = vsub.f32 %v1396, %v1457
      %v1493 = vsub.f32 %v1397, %v1459
      %v1494 = vsub.f32 %v1398, %v1461
      %v1495 = vsub.f32 %v1399, %v1463
      %v1496 = vmul.f32 %v1464, 1.442695
      %v1497 = vpow.pop %v1496
      %v1498 = vmul.f32 %v1465, 1.442695
      %v1499 = vpow.pop %v1498
      %v1500 = vmul.f32 %v1466, 1.442695
      %v1501 = vpow.pop %v1500
      %v1502 = vmul.f32 %v1467, 1.442695
      %v1503 = vpow.pop %v1502
      %v1504 = vmul.f32 %v1468, 1.442695
      %v1505 = vpow.pop %v1504
      %v1506 = vmul.f32 %v1469, 1.442695
      %v1507 = vpow.pop %v1506
      %v1508 = vmul.f32 %v1470, 1.442695
      %v1509 = vpow.pop %v1508
      %v1510 = vmul.f32 %v1471, 1.442695
      %v1511 = vpow.pop %v1510
      %v1512 = vmul.f32 %v1472, 1.442695
      %v1513 = vpow.pop %v1512
      %v1514 = vmul.f32 %v1473, 1.442695
      %v1515 = vpow.pop %v1514
      %v1516 = vmul.f32 %v1474, 1.442695
      %v1517 = vpow.pop %v1516
      %v1518 = vmul.f32 %v1475, 1.442695
      %v1519 = vpow.pop %v1518
      %v1520 = vmul.f32 %v1476, 1.442695
      %v1521 = vpow.pop %v1520
      %v1522 = vmul.f32 %v1477, 1.442695
      %v1523 = vpow.pop %v1522
      %v1524 = vmul.f32 %v1478, 1.442695
      %v1525 = vpow.pop %v1524
      %v1526 = vmul.f32 %v1479, 1.442695
      %v1527 = vpow.pop %v1526
      %v1528 = vmul.f32 %v1480, 1.442695
      %v1529 = vpow.pop %v1528
      %v1530 = vmul.f32 %v1481, 1.442695
      %v1531 = vpow.pop %v1530
      %v1532 = vmul.f32 %v1482, 1.442695
      %v1533 = vpow.pop %v1532
      %v1534 = vmul.f32 %v1483, 1.442695
      %v1535 = vpow.pop %v1534
      %v1536 = vmul.f32 %v1484, 1.442695
      %v1537 = vpow.pop %v1536
      %v1538 = vmul.f32 %v1485, 1.442695
      %v1539 = vpow.pop %v1538
      %v1540 = vmul.f32 %v1486, 1.442695
      %v1541 = vpow.pop %v1540
      %v1542 = vmul.f32 %v1487, 1.442695
      %v1543 = vpow.pop %v1542
      %v1544 = vmul.f32 %v1488, 1.442695
      %v1545 = vpow.pop %v1544
      %v1546 = vmul.f32 %v1489, 1.442695
      %v1547 = vpow.pop %v1546
      %v1548 = vmul.f32 %v1490, 1.442695
      %v1549 = vpow.pop %v1548
      %v1550 = vmul.f32 %v1491, 1.442695
      %v1551 = vpow.pop %v1550
      %v1552 = vmul.f32 %v1492, 1.442695
      %v1553 = vpow.pop %v1552
      %v1554 = vmul.f32 %v1493, 1.442695
      %v1555 = vpow.pop %v1554
      %v1556 = vmul.f32 %v1494, 1.442695
      %v1557 = vpow.pop %v1556
      %v1558 = vmul.f32 %v1495, 1.442695
      %v1559 = vpow.pop %v1558
      %v1560 = vmul.f32 %v1497, %v693
      %v1561 = vmul.f32 %v1499, %v694
      %v1562 = vmul.f32 %v1501, %v695
      %v1563 = vmul.f32 %v1503, %v696
      %v1564 = vmul.f32 %v1505, %v697
      %v1565 = vmul.f32 %v1507, %v698
      %v1566 = vmul.f32 %v1509, %v699
      %v1567 = vmul.f32 %v1511, %v700
      %v1568 = vmul.f32 %v1513, %v701
      %v1569 = vmul.f32 %v1515, %v702
      %v1570 = vmul.f32 %v1517, %v703
      %v1571 = vmul.f32 %v1519, %v704
      %v1572 = vmul.f32 %v1521, %v705
      %v1573 = vmul.f32 %v1523, %v706
      %v1574 = vmul.f32 %v1525, %v707
      %v1575 = vmul.f32 %v1527, %v708
      %v1576 = vmul.f32 %v1529, %v709
      %v1577 = vmul.f32 %v1531, %v710
      %v1578 = vmul.f32 %v1533, %v711
      %v1579 = vmul.f32 %v1535, %v712
      %v1580 = vmul.f32 %v1537, %v713
      %v1581 = vmul.f32 %v1539, %v714
      %v1582 = vmul.f32 %v1541, %v715
      %v1583 = vmul.f32 %v1543, %v716
      %v1584 = vmul.f32 %v1545, %v717
      %v1585 = vmul.f32 %v1547, %v718
      %v1586 = vmul.f32 %v1549, %v719
      %v1587 = vmul.f32 %v1551, %v720
      %v1588 = vmul.f32 %v1553, %v721
      %v1589 = vmul.f32 %v1555, %v722
      %v1590 = vmul.f32 %v1557, %v723
      %v1591 = vmul.f32 %v1559, %v724
      %1592 = vadd.xlane.f32.xlu0 %v1560
      %v1593 = vpop.xlane.xlu0 %1592
      %1594 = vadd.xlane.f32.xlu0 %v1561
      %v1595 = vpop.xlane.xlu0 %1594
      %1596 = vadd.xlane.f32.xlu0 %v1562
      %v1597 = vpop.xlane.xlu0 %1596
      %1598 = vadd.xlane.f32.xlu0 %v1563
      %v1599 = vpop.xlane.xlu0 %1598
      %1600 = vadd.xlane.f32.xlu0 %v1564
      %v1601 = vpop.xlane.xlu0 %1600
      %1602 = vadd.xlane.f32.xlu0 %v1565
      %v1603 = vpop.xlane.xlu0 %1602
      %1604 = vadd.xlane.f32.xlu0 %v1566
      %v1605 = vpop.xlane.xlu0 %1604
      %1606 = vadd.xlane.f32.xlu0 %v1567
      %v1607 = vpop.xlane.xlu0 %1606
      %1608 = vadd.xlane.f32.xlu0 %v1568
      %v1609 = vpop.xlane.xlu0 %1608
      %1610 = vadd.xlane.f32.xlu0 %v1569
      %v1611 = vpop.xlane.xlu0 %1610
      %1612 = vadd.xlane.f32.xlu0 %v1570
      %v1613 = vpop.xlane.xlu0 %1612
      %1614 = vadd.xlane.f32.xlu0 %v1571
      %v1615 = vpop.xlane.xlu0 %1614
      %1616 = vadd.xlane.f32.xlu0 %v1572
      %v1617 = vpop.xlane.xlu0 %1616
      %1618 = vadd.xlane.f32.xlu0 %v1573
      %v1619 = vpop.xlane.xlu0 %1618
      %1620 = vadd.xlane.f32.xlu0 %v1574
      %v1621 = vpop.xlane.xlu0 %1620
      %1622 = vadd.xlane.f32.xlu0 %v1575
      %v1623 = vpop.xlane.xlu0 %1622
      %1624 = vadd.xlane.f32.xlu0 %v1576
      %v1625 = vpop.xlane.xlu0 %1624
      %1626 = vadd.xlane.f32.xlu0 %v1577
      %v1627 = vpop.xlane.xlu0 %1626
      %1628 = vadd.xlane.f32.xlu0 %v1578
      %v1629 = vpop.xlane.xlu0 %1628
      %1630 = vadd.xlane.f32.xlu0 %v1579
      %v1631 = vpop.xlane.xlu0 %1630
      %1632 = vadd.xlane.f32.xlu0 %v1580
      %v1633 = vpop.xlane.xlu0 %1632
      %1634 = vadd.xlane.f32.xlu0 %v1581
      %v1635 = vpop.xlane.xlu0 %1634
      %1636 = vadd.xlane.f32.xlu0 %v1582
      %v1637 = vpop.xlane.xlu0 %1636
      %1638 = vadd.xlane.f32.xlu0 %v1583
      %v1639 = vpop.xlane.xlu0 %1638
      %1640 = vadd.xlane.f32.xlu0 %v1584
      %v1641 = vpop.xlane.xlu0 %1640
      %1642 = vadd.xlane.f32.xlu0 %v1585
      %v1643 = vpop.xlane.xlu0 %1642
      %1644 = vadd.xlane.f32.xlu0 %v1586
      %v1645 = vpop.xlane.xlu0 %1644
      %1646 = vadd.xlane.f32.xlu0 %v1587
      %v1647 = vpop.xlane.xlu0 %1646
      %1648 = vadd.xlane.f32.xlu0 %v1588
      %v1649 = vpop.xlane.xlu0 %1648
      %1650 = vadd.xlane.f32.xlu0 %v1589
      %v1651 = vpop.xlane.xlu0 %1650
      %1652 = vadd.xlane.f32.xlu0 %v1590
      %v1653 = vpop.xlane.xlu0 %1652
      %1654 = vadd.xlane.f32.xlu0 %v1591
      %v1655 = vpop.xlane.xlu0 %1654
      %v1656 = vmax.f32 %v1593, 1e-30
      %v1657 = vmax.f32 %v1595, 1e-30
      %v1658 = vmax.f32 %v1597, 1e-30
      %v1659 = vmax.f32 %v1599, 1e-30
      %v1660 = vmax.f32 %v1601, 1e-30
      %v1661 = vmax.f32 %v1603, 1e-30
      %v1662 = vmax.f32 %v1605, 1e-30
      %v1663 = vmax.f32 %v1607, 1e-30
      %v1664 = vmax.f32 %v1609, 1e-30
      %v1665 = vmax.f32 %v1611, 1e-30
      %v1666 = vmax.f32 %v1613, 1e-30
      %v1667 = vmax.f32 %v1615, 1e-30
      %v1668 = vmax.f32 %v1617, 1e-30
      %v1669 = vmax.f32 %v1619, 1e-30
      %v1670 = vmax.f32 %v1621, 1e-30
      %v1671 = vmax.f32 %v1623, 1e-30
      %v1672 = vmax.f32 %v1625, 1e-30
      %v1673 = vmax.f32 %v1627, 1e-30
      %v1674 = vmax.f32 %v1629, 1e-30
      %v1675 = vmax.f32 %v1631, 1e-30
      %v1676 = vmax.f32 %v1633, 1e-30
      %v1677 = vmax.f32 %v1635, 1e-30
      %v1678 = vmax.f32 %v1637, 1e-30
      %v1679 = vmax.f32 %v1639, 1e-30
      %v1680 = vmax.f32 %v1641, 1e-30
      %v1681 = vmax.f32 %v1643, 1e-30
      %v1682 = vmax.f32 %v1645, 1e-30
      %v1683 = vmax.f32 %v1647, 1e-30
      %v1684 = vmax.f32 %v1649, 1e-30
      %v1685 = vmax.f32 %v1651, 1e-30
      %v1686 = vmax.f32 %v1653, 1e-30
      %v1687 = vmax.f32 %v1655, 1e-30
      %v1688 = vrcp.pop %v1656
      %v1689 = vrcp.pop %v1657
      %v1690 = vrcp.pop %v1658
      %v1691 = vrcp.pop %v1659
      %v1692 = vrcp.pop %v1660
      %v1693 = vrcp.pop %v1661
      %v1694 = vrcp.pop %v1662
      %v1695 = vrcp.pop %v1663
      %v1696 = vrcp.pop %v1664
      %v1697 = vrcp.pop %v1665
      %v1698 = vrcp.pop %v1666
      %v1699 = vrcp.pop %v1667
      %v1700 = vrcp.pop %v1668
      %v1701 = vrcp.pop %v1669
      %v1702 = vrcp.pop %v1670
      %v1703 = vrcp.pop %v1671
      %v1704 = vrcp.pop %v1672
      %v1705 = vrcp.pop %v1673
      %v1706 = vrcp.pop %v1674
      %v1707 = vrcp.pop %v1675
      %v1708 = vrcp.pop %v1676
      %v1709 = vrcp.pop %v1677
      %v1710 = vrcp.pop %v1678
      %v1711 = vrcp.pop %v1679
      %v1712 = vrcp.pop %v1680
      %v1713 = vrcp.pop %v1681
      %v1714 = vrcp.pop %v1682
      %v1715 = vrcp.pop %v1683
      %v1716 = vrcp.pop %v1684
      %v1717 = vrcp.pop %v1685
      %v1718 = vrcp.pop %v1686
      %v1719 = vrcp.pop %v1687
      %v1720 = vmul.f32 %v1560, %v1688
      %v1721 = vmul.f32 %v1561, %v1689
      %v1722 = vmul.f32 %v1562, %v1690
      %v1723 = vmul.f32 %v1563, %v1691
      %v1724 = vmul.f32 %v1564, %v1692
      %v1725 = vmul.f32 %v1565, %v1693
      %v1726 = vmul.f32 %v1566, %v1694
      %v1727 = vmul.f32 %v1567, %v1695
      %v1728 = vmul.f32 %v1568, %v1696
      %v1729 = vmul.f32 %v1569, %v1697
      %v1730 = vmul.f32 %v1570, %v1698
      %v1731 = vmul.f32 %v1571, %v1699
      %v1732 = vmul.f32 %v1572, %v1700
      %v1733 = vmul.f32 %v1573, %v1701
      %v1734 = vmul.f32 %v1574, %v1702
      %v1735 = vmul.f32 %v1575, %v1703
      %v1736 = vmul.f32 %v1576, %v1704
      %v1737 = vmul.f32 %v1577, %v1705
      %v1738 = vmul.f32 %v1578, %v1706
      %v1739 = vmul.f32 %v1579, %v1707
      %v1740 = vmul.f32 %v1580, %v1708
      %v1741 = vmul.f32 %v1581, %v1709
      %v1742 = vmul.f32 %v1582, %v1710
      %v1743 = vmul.f32 %v1583, %v1711
      %v1744 = vmul.f32 %v1584, %v1712
      %v1745 = vmul.f32 %v1585, %v1713
      %v1746 = vmul.f32 %v1586, %v1714
      %v1747 = vmul.f32 %v1587, %v1715
      %v1748 = vmul.f32 %v1588, %v1716
      %v1749 = vmul.f32 %v1589, %v1717
      %v1750 = vmul.f32 %v1590, %v1718
      %v1751 = vmul.f32 %v1591, %v1719
      %v1752 = vpack.c.bf16 %v1721, %v1720
      %v1753 = vpack.c.bf16 %v1723, %v1722
      %v1754 = vpack.c.bf16 %v1725, %v1724
      %v1755 = vpack.c.bf16 %v1727, %v1726
      %v1756 = vpack.c.bf16 %v1729, %v1728
      %v1757 = vpack.c.bf16 %v1731, %v1730
      %v1758 = vpack.c.bf16 %v1733, %v1732
      %v1759 = vpack.c.bf16 %v1735, %v1734
      %v1760 = vpack.c.bf16 %v1737, %v1736
      %v1761 = vpack.c.bf16 %v1739, %v1738
      %v1762 = vpack.c.bf16 %v1741, %v1740
      %v1763 = vpack.c.bf16 %v1743, %v1742
      %v1764 = vpack.c.bf16 %v1745, %v1744
      %v1765 = vpack.c.bf16 %v1747, %v1746
      %v1766 = vpack.c.bf16 %v1749, %v1748
      %v1767 = vpack.c.bf16 %v1751, %v1750
      %v1768 = vpack.c.bf16 %v500, %v495
      %v1769 = vpack.c.bf16 %v510, %v505
      %v1770 = vpack.c.bf16 %v520, %v515
      %v1771 = vpack.c.bf16 %v530, %v525
      %v1772 = vpack.c.bf16 %v540, %v535
      %v1773 = vpack.c.bf16 %v550, %v545
      %v1774 = vpack.c.bf16 %v560, %v555
      %v1775 = vpack.c.bf16 %v570, %v565
      %v1776 = vpack.c.bf16 %v580, %v575
      %v1777 = vpack.c.bf16 %v590, %v585
      %v1778 = vpack.c.bf16 %v600, %v595
      %v1779 = vpack.c.bf16 %v610, %v605
      %v1780 = vpack.c.bf16 %v620, %v615
      %v1781 = vpack.c.bf16 %v630, %v625
      %v1782 = vpack.c.bf16 %v640, %v635
      %v1783 = vpack.c.bf16 %v650, %v645
      %1784 = vmatprep.subr.bf16.mxu0 0
      %1785 = vmatpush1.bf16.msra.mxu0 %v1768
      %1786 = vmatprep.subr.bf16.mxu0 0
      %1787 = vmatpush1.bf16.msra.mxu0 %v1769
      %1788 = vmatprep.subr.bf16.mxu0 0
      %1789 = vmatpush1.bf16.msra.mxu0 %v1770
      %1790 = vmatprep.subr.bf16.mxu0 0
      %1791 = vmatpush1.bf16.msra.mxu0 %v1771
      %1792 = vmatprep.subr.bf16.mxu0 0
      %1793 = vmatpush1.bf16.msra.mxu0 %v1772
      %1794 = vmatprep.subr.bf16.mxu0 0
      %1795 = vmatpush1.bf16.msra.mxu0 %v1773
      %1796 = vmatprep.subr.bf16.mxu0 0
      %1797 = vmatpush1.bf16.msra.mxu0 %v1774
      %1798 = vmatprep.subr.bf16.mxu0 0
      %1799 = vmatpush1.bf16.msra.mxu0 %v1775
      %1800 = vmatprep.subr.bf16.mxu0 0
      %1801 = vmatpush1.bf16.msra.mxu0 0
      %1802 = vmatprep.subr.bf16.mxu0 0
      %1803 = vmatpush1.bf16.msra.mxu0 0
      %1804 = vmatprep.subr.bf16.mxu0 0
      %1805 = vmatpush1.bf16.msra.mxu0 0
      %1806 = vmatprep.subr.bf16.mxu0 0
      %1807 = vmatpush1.bf16.msra.mxu0 0
      %1808 = vmatprep.subr.bf16.mxu0 0
      %1809 = vmatpush1.bf16.msra.mxu0 0
      %1810 = vmatprep.subr.bf16.mxu0 0
      %1811 = vmatpush1.bf16.msra.mxu0 0
      %1812 = vmatprep.subr.bf16.mxu0 0
      %1813 = vmatpush1.bf16.msra.mxu0 0
      %1814 = vmatprep.subr.bf16.mxu0 0
      %1815 = vmatpush1.bf16.msra.mxu0 0
      %1816 = vmatprep.mubr.bf16.mxu0 0
      %1817 = vmatmul.mubr.bf16.gmra.mrb[0].mxu0 %v1752
      %v1818 = vpop.f32.mrb[0].mxu0
      %v1819 = vadd.f32 0.0, %v1818
      %v1820 = vpop.f32.mrb[0].mxu0
      %v1821 = vpop.f32.mrb[0].mxu0
      %v1822 = vadd.f32 0.0, %v1821
      %v1823 = vpop.f32.mrb[0].mxu0
      %1824 = vmatprep.mubr.bf16.mxu0 0
      %1825 = vmatmul.mubr.bf16.gmra.mrb[0].mxu0 %v1753
      %v1826 = vpop.f32.mrb[0].mxu0
      %v1827 = vadd.f32 0.0, %v1826
      %v1828 = vpop.f32.mrb[0].mxu0
      %v1829 = vpop.f32.mrb[0].mxu0
      %v1830 = vadd.f32 0.0, %v1829
      %v1831 = vpop.f32.mrb[0].mxu0
      %1832 = vmatprep.mubr.bf16.mxu0 0
      %1833 = vmatmul.mubr.bf16.gmra.mrb[0].mxu0 %v1754
      %v1834 = vpop.f32.mrb[0].mxu0
      %v1835 = vadd.f32 0.0, %v1834
      %v1836 = vpop.f32.mrb[0].mxu0
      %v1837 = vpop.f32.mrb[0].mxu0
      %v1838 = vadd.f32 0.0, %v1837
      %v1839 = vpop.f32.mrb[0].mxu0
      %1840 = vmatprep.mubr.bf16.mxu0 0
      %1841 = vmatmul.mubr.bf16.gmra.mrb[0].mxu0 %v1755
      %v1842 = vpop.f32.mrb[0].mxu0
      %v1843 = vadd.f32 0.0, %v1842
      %v1844 = vpop.f32.mrb[0].mxu0
      %v1845 = vpop.f32.mrb[0].mxu0
      %v1846 = vadd.f32 0.0, %v1845
      %v1847 = vpop.f32.mrb[0].mxu0
      %1848 = vmatprep.mubr.bf16.mxu0 0
      %1849 = vmatmul.mubr.bf16.gmra.mrb[0].mxu0 %v1756
      %v1850 = vpop.f32.mrb[0].mxu0
      %v1851 = vadd.f32 0.0, %v1850
      %v1852 = vpop.f32.mrb[0].mxu0
      %v1853 = vpop.f32.mrb[0].mxu0
      %v1854 = vadd.f32 0.0, %v1853
      %v1855 = vpop.f32.mrb[0].mxu0
      %1856 = vmatprep.mubr.bf16.mxu0 0
      %1857 = vmatmul.mubr.bf16.gmra.mrb[0].mxu0 %v1757
      %v1858 = vpop.f32.mrb[0].mxu0
      %v1859 = vadd.f32 0.0, %v1858
      %v1860 = vpop.f32.mrb[0].mxu0
      %v1861 = vpop.f32.mrb[0].mxu0
      %v1862 = vadd.f32 0.0, %v1861
      %v1863 = vpop.f32.mrb[0].mxu0
      %1864 = vmatprep.mubr.bf16.mxu0 0
      %1865 = vmatmul.mubr.bf16.gmra.mrb[0].mxu0 %v1758
      %v1866 = vpop.f32.mrb[0].mxu0
      %v1867 = vadd.f32 0.0, %v1866
      %v1868 = vpop.f32.mrb[0].mxu0
      %v1869 = vpop.f32.mrb[0].mxu0
      %v1870 = vadd.f32 0.0, %v1869
      %v1871 = vpop.f32.mrb[0].mxu0
      %1872 = vmatprep.mubr.bf16.mxu0 0
      %1873 = vmatmul.mubr.bf16.gmra.mrb[0].mxu0 %v1759
      %v1874 = vpop.f32.mrb[0].mxu0
      %v1875 = vadd.f32 0.0, %v1874
      %v1876 = vpop.f32.mrb[0].mxu0
      %v1877 = vpop.f32.mrb[0].mxu0
      %v1878 = vadd.f32 0.0, %v1877
      %v1879 = vpop.f32.mrb[0].mxu0
      %1880 = vdwg.mxu0
      %1881 = vmatprep.subr.bf16.mxu0 0
      %1882 = vmatpush1.bf16.msra.mxu0 %v1776
      %1883 = vmatprep.subr.bf16.mxu0 0
      %1884 = vmatpush1.bf16.msra.mxu0 %v1777
      %1885 = vmatprep.subr.bf16.mxu0 0
      %1886 = vmatpush1.bf16.msra.mxu0 %v1778
      %1887 = vmatprep.subr.bf16.mxu0 0
      %1888 = vmatpush1.bf16.msra.mxu0 %v1779
      %1889 = vmatprep.subr.bf16.mxu0 0
      %1890 = vmatpush1.bf16.msra.mxu0 %v1780
      %1891 = vmatprep.subr.bf16.mxu0 0
      %1892 = vmatpush1.bf16.msra.mxu0 %v1781
      %1893 = vmatprep.subr.bf16.mxu0 0
      %1894 = vmatpush1.bf16.msra.mxu0 %v1782
      %1895 = vmatprep.subr.bf16.mxu0 0
      %1896 = vmatpush1.bf16.msra.mxu0 %v1783
      %1897 = vmatprep.subr.bf16.mxu0 0
      %1898 = vmatpush1.bf16.msra.mxu0 0
      %1899 = vmatprep.subr.bf16.mxu0 0
      %1900 = vmatpush1.bf16.msra.mxu0 0
      %1901 = vmatprep.subr.bf16.mxu0 0
      %1902 = vmatpush1.bf16.msra.mxu0 0
      %1903 = vmatprep.subr.bf16.mxu0 0
      %1904 = vmatpush1.bf16.msra.mxu0 0
      %1905 = vmatprep.subr.bf16.mxu0 0
      %1906 = vmatpush1.bf16.msra.mxu0 0
      %1907 = vmatprep.subr.bf16.mxu0 0
      %1908 = vmatpush1.bf16.msra.mxu0 0
      %1909 = vmatprep.subr.bf16.mxu0 0
      %1910 = vmatpush1.bf16.msra.mxu0 0
      %1911 = vmatprep.subr.bf16.mxu0 0
      %1912 = vmatpush1.bf16.msra.mxu0 0
      %1913 = vmatprep.mubr.bf16.mxu0 0
      %1914 = vmatmul.mubr.bf16.gmra.mrb[0].mxu0 %v1760
      %v1915 = vpop.f32.mrb[0].mxu0
      %v1916 = vadd.f32 0.0, %v1915
      %v1917 = vpop.f32.mrb[0].mxu0
      %v1918 = vpop.f32.mrb[0].mxu0
      %v1919 = vadd.f32 0.0, %v1918
      %v1920 = vpop.f32.mrb[0].mxu0
      %1921 = vmatprep.mubr.bf16.mxu0 0
      %1922 = vmatmul.mubr.bf16.gmra.mrb[0].mxu0 %v1761
      %v1923 = vpop.f32.mrb[0].mxu0
      %v1924 = vadd.f32 0.0, %v1923
      %v1925 = vpop.f32.mrb[0].mxu0
      %v1926 = vpop.f32.mrb[0].mxu0
      %v1927 = vadd.f32 0.0, %v1926
      %v1928 = vpop.f32.mrb[0].mxu0
      %1929 = vmatprep.mubr.bf16.mxu0 0
      %1930 = vmatmul.mubr.bf16.gmra.mrb[0].mxu0 %v1762
      %v1931 = vpop.f32.mrb[0].mxu0
      %v1932 = vadd.f32 0.0, %v1931
      %v1933 = vpop.f32.mrb[0].mxu0
      %v1934 = vpop.f32.mrb[0].mxu0
      %v1935 = vadd.f32 0.0, %v1934
      %v1936 = vpop.f32.mrb[0].mxu0
      %1937 = vmatprep.mubr.bf16.mxu0 0
      %1938 = vmatmul.mubr.bf16.gmra.mrb[0].mxu0 %v1763
      %v1939 = vpop.f32.mrb[0].mxu0
      %v1940 = vadd.f32 0.0, %v1939
      %v1941 = vpop.f32.mrb[0].mxu0
      %v1942 = vpop.f32.mrb[0].mxu0
      %v1943 = vadd.f32 0.0, %v1942
      %v1944 = vpop.f32.mrb[0].mxu0
      %1945 = vmatprep.mubr.bf16.mxu0 0
      %1946 = vmatmul.mubr.bf16.gmra.mrb[0].mxu0 %v1764
      %v1947 = vpop.f32.mrb[0].mxu0
      %v1948 = vadd.f32 0.0, %v1947
      %v1949 = vpop.f32.mrb[0].mxu0
      %v1950 = vpop.f32.mrb[0].mxu0
      %v1951 = vadd.f32 0.0, %v1950
      %v1952 = vpop.f32.mrb[0].mxu0
      %1953 = vmatprep.mubr.bf16.mxu0 0
      %1954 = vmatmul.mubr.bf16.gmra.mrb[0].mxu0 %v1765
      %v1955 = vpop.f32.mrb[0].mxu0
      %v1956 = vadd.f32 0.0, %v1955
      %v1957 = vpop.f32.mrb[0].mxu0
      %v1958 = vpop.f32.mrb[0].mxu0
      %v1959 = vadd.f32 0.0, %v1958
      %v1960 = vpop.f32.mrb[0].mxu0
      %1961 = vmatprep.mubr.bf16.mxu0 0
      %1962 = vmatmul.mubr.bf16.gmra.mrb[0].mxu0 %v1766
      %v1963 = vpop.f32.mrb[0].mxu0
      %v1964 = vadd.f32 0.0, %v1963
      %v1965 = vpop.f32.mrb[0].mxu0
      %v1966 = vpop.f32.mrb[0].mxu0
      %v1967 = vadd.f32 0.0, %v1966
      %v1968 = vpop.f32.mrb[0].mxu0
      %1969 = vmatprep.mubr.bf16.mxu0 0
      %1970 = vmatmul.mubr.bf16.gmra.mrb[0].mxu0 %v1767
      %v1971 = vpop.f32.mrb[0].mxu0
      %v1972 = vadd.f32 0.0, %v1971
      %v1973 = vpop.f32.mrb[0].mxu0
      %v1974 = vpop.f32.mrb[0].mxu0
      %v1975 = vadd.f32 0.0, %v1974
      %v1976 = vpop.f32.mrb[0].mxu0
      %1977 = vdwg.mxu0
      %v1978 = vsub.f32 %v495, %v1819
      %v1979 = vsub.f32 %v500, %v1822
      %v1980 = vsub.f32 %v505, %v1827
      %v1981 = vsub.f32 %v510, %v1830
      %v1982 = vsub.f32 %v515, %v1835
      %v1983 = vsub.f32 %v520, %v1838
      %v1984 = vsub.f32 %v525, %v1843
      %v1985 = vsub.f32 %v530, %v1846
      %v1986 = vsub.f32 %v535, %v1851
      %v1987 = vsub.f32 %v540, %v1854
      %v1988 = vsub.f32 %v545, %v1859
      %v1989 = vsub.f32 %v550, %v1862
      %v1990 = vsub.f32 %v555, %v1867
      %v1991 = vsub.f32 %v560, %v1870
      %v1992 = vsub.f32 %v565, %v1875
      %v1993 = vsub.f32 %v570, %v1878
      %v1994 = vsub.f32 %v575, %v1916
      %v1995 = vsub.f32 %v580, %v1919
      %v1996 = vsub.f32 %v585, %v1924
      %v1997 = vsub.f32 %v590, %v1927
      %v1998 = vsub.f32 %v595, %v1932
      %v1999 = vsub.f32 %v600, %v1935
      %v2000 = vsub.f32 %v605, %v1940
      %v2001 = vsub.f32 %v610, %v1943
      %v2002 = vsub.f32 %v615, %v1948
      %v2003 = vsub.f32 %v620, %v1951
      %v2004 = vsub.f32 %v625, %v1956
      %v2005 = vsub.f32 %v630, %v1959
      %v2006 = vsub.f32 %v635, %v1964
      %v2007 = vsub.f32 %v640, %v1967
      %v2008 = vsub.f32 %v645, %v1972
      %v2009 = vsub.f32 %v650, %v1975
      %v2010 = vmax.f32 %v1978, 0.0
      %v2011 = vmax.f32 %v1979, 0.0
      %v2012 = vmax.f32 %v1980, 0.0
      %v2013 = vmax.f32 %v1981, 0.0
      %v2014 = vmax.f32 %v1982, 0.0
      %v2015 = vmax.f32 %v1983, 0.0
      %v2016 = vmax.f32 %v1984, 0.0
      %v2017 = vmax.f32 %v1985, 0.0
      %v2018 = vmax.f32 %v1986, 0.0
      %v2019 = vmax.f32 %v1987, 0.0
      %v2020 = vmax.f32 %v1988, 0.0
      %v2021 = vmax.f32 %v1989, 0.0
      %v2022 = vmax.f32 %v1990, 0.0
      %v2023 = vmax.f32 %v1991, 0.0
      %v2024 = vmax.f32 %v1992, 0.0
      %v2025 = vmax.f32 %v1993, 0.0
      %v2026 = vmax.f32 %v1994, 0.0
      %v2027 = vmax.f32 %v1995, 0.0
      %v2028 = vmax.f32 %v1996, 0.0
      %v2029 = vmax.f32 %v1997, 0.0
      %v2030 = vmax.f32 %v1998, 0.0
      %v2031 = vmax.f32 %v1999, 0.0
      %v2032 = vmax.f32 %v2000, 0.0
      %v2033 = vmax.f32 %v2001, 0.0
      %v2034 = vmax.f32 %v2002, 0.0
      %v2035 = vmax.f32 %v2003, 0.0
      %v2036 = vmax.f32 %v2004, 0.0
      %v2037 = vmax.f32 %v2005, 0.0
      %v2038 = vmax.f32 %v2006, 0.0
      %v2039 = vmax.f32 %v2007, 0.0
      %v2040 = vmax.f32 %v2008, 0.0
      %v2041 = vmax.f32 %v2009, 0.0
      %v2042 = vld [vmem:[%s274] sm:$0xff]
      %v2043 = vld [vmem:[%s274 + $0x8] sm:$0xff]
      %v2044 = vld [vmem:[%s274 + $0x10] sm:$0xff]
      %v2045 = vld [vmem:[%s274 + $0x18] sm:$0xff]
      %v2046 = vld [vmem:[%s274 + $0x20] sm:$0xff]
      %v2047 = vld [vmem:[%s274 + $0x28] sm:$0xff]
      %v2048 = vld [vmem:[%s274 + $0x30] sm:$0xff]
      %v2049 = vld [vmem:[%s274 + $0x38] sm:$0xff]
      %v2050 = vld [vmem:[%s274 + $0x40] sm:$0xff]
      %v2051 = vld [vmem:[%s274 + $0x48] sm:$0xff]
      %v2052 = vld [vmem:[%s274 + $0x50] sm:$0xff]
      %v2053 = vld [vmem:[%s274 + $0x58] sm:$0xff]
      %v2054 = vld [vmem:[%s274 + $0x60] sm:$0xff]
      %v2055 = vld [vmem:[%s274 + $0x68] sm:$0xff]
      %v2056 = vld [vmem:[%s274 + $0x70] sm:$0xff]
      %v2057 = vld [vmem:[%s274 + $0x78] sm:$0xff]
      %v2058 = vld [vmem:[%s274 + $0x80] sm:$0xff]
      %v2059 = vld [vmem:[%s274 + $0x88] sm:$0xff]
      %v2060 = vld [vmem:[%s274 + $0x90] sm:$0xff]
      %v2061 = vld [vmem:[%s274 + $0x98] sm:$0xff]
      %v2062 = vld [vmem:[%s274 + $0xa0] sm:$0xff]
      %v2063 = vld [vmem:[%s274 + $0xa8] sm:$0xff]
      %v2064 = vld [vmem:[%s274 + $0xb0] sm:$0xff]
      %v2065 = vld [vmem:[%s274 + $0xb8] sm:$0xff]
      %v2066 = vld [vmem:[%s274 + $0xc0] sm:$0xff]
      %v2067 = vld [vmem:[%s274 + $0xc8] sm:$0xff]
      %v2068 = vld [vmem:[%s274 + $0xd0] sm:$0xff]
      %v2069 = vld [vmem:[%s274 + $0xd8] sm:$0xff]
      %v2070 = vld [vmem:[%s274 + $0xe0] sm:$0xff]
      %v2071 = vld [vmem:[%s274 + $0xe8] sm:$0xff]
      %v2072 = vld [vmem:[%s274 + $0xf0] sm:$0xff]
      %v2073 = vld [vmem:[%s274 + $0xf8] sm:$0xff]
      %2075 = vset.pattern.permute.xlu0 0
      %2076 = vperm.xlu0 %2075, %v2042
      %v2077 = vpop.permute.xlu0 %2076
      %2080 = vset.pattern.permute.xlu0 0
      %2081 = vperm.xlu0 %2080, %v2043
      %v2082 = vpop.permute.xlu0 %2081
      %2085 = vset.pattern.permute.xlu0 0
      %2086 = vperm.xlu0 %2085, %v2044
      %v2087 = vpop.permute.xlu0 %2086
      %2090 = vset.pattern.permute.xlu0 0
      %2091 = vperm.xlu0 %2090, %v2045
      %v2092 = vpop.permute.xlu0 %2091
      %2095 = vset.pattern.permute.xlu0 0
      %2096 = vperm.xlu0 %2095, %v2046
      %v2097 = vpop.permute.xlu0 %2096
      %2100 = vset.pattern.permute.xlu0 0
      %2101 = vperm.xlu0 %2100, %v2047
      %v2102 = vpop.permute.xlu0 %2101
      %2105 = vset.pattern.permute.xlu0 0
      %2106 = vperm.xlu0 %2105, %v2048
      %v2107 = vpop.permute.xlu0 %2106
      %2110 = vset.pattern.permute.xlu0 0
      %2111 = vperm.xlu0 %2110, %v2049
      %v2112 = vpop.permute.xlu0 %2111
      %2115 = vset.pattern.permute.xlu0 0
      %2116 = vperm.xlu0 %2115, %v2050
      %v2117 = vpop.permute.xlu0 %2116
      %2120 = vset.pattern.permute.xlu0 0
      %2121 = vperm.xlu0 %2120, %v2051
      %v2122 = vpop.permute.xlu0 %2121
      %2125 = vset.pattern.permute.xlu0 0
      %2126 = vperm.xlu0 %2125, %v2052
      %v2127 = vpop.permute.xlu0 %2126
      %2130 = vset.pattern.permute.xlu0 0
      %2131 = vperm.xlu0 %2130, %v2053
      %v2132 = vpop.permute.xlu0 %2131
      %2135 = vset.pattern.permute.xlu0 0
      %2136 = vperm.xlu0 %2135, %v2054
      %v2137 = vpop.permute.xlu0 %2136
      %2140 = vset.pattern.permute.xlu0 0
      %2141 = vperm.xlu0 %2140, %v2055
      %v2142 = vpop.permute.xlu0 %2141
      %2145 = vset.pattern.permute.xlu0 0
      %2146 = vperm.xlu0 %2145, %v2056
      %v2147 = vpop.permute.xlu0 %2146
      %2150 = vset.pattern.permute.xlu0 0
      %2151 = vperm.xlu0 %2150, %v2057
      %v2152 = vpop.permute.xlu0 %2151
      %2155 = vset.pattern.permute.xlu0 0
      %2156 = vperm.xlu0 %2155, %v2058
      %v2157 = vpop.permute.xlu0 %2156
      %2160 = vset.pattern.permute.xlu0 0
      %2161 = vperm.xlu0 %2160, %v2059
      %v2162 = vpop.permute.xlu0 %2161
      %2165 = vset.pattern.permute.xlu0 0
      %2166 = vperm.xlu0 %2165, %v2060
      %v2167 = vpop.permute.xlu0 %2166
      %2170 = vset.pattern.permute.xlu0 0
      %2171 = vperm.xlu0 %2170, %v2061
      %v2172 = vpop.permute.xlu0 %2171
      %2175 = vset.pattern.permute.xlu0 0
      %2176 = vperm.xlu0 %2175, %v2062
      %v2177 = vpop.permute.xlu0 %2176
      %2180 = vset.pattern.permute.xlu0 0
      %2181 = vperm.xlu0 %2180, %v2063
      %v2182 = vpop.permute.xlu0 %2181
      %2185 = vset.pattern.permute.xlu0 0
      %2186 = vperm.xlu0 %2185, %v2064
      %v2187 = vpop.permute.xlu0 %2186
      %2190 = vset.pattern.permute.xlu0 0
      %2191 = vperm.xlu0 %2190, %v2065
      %v2192 = vpop.permute.xlu0 %2191
      %2195 = vset.pattern.permute.xlu0 0
      %2196 = vperm.xlu0 %2195, %v2066
      %v2197 = vpop.permute.xlu0 %2196
      %2200 = vset.pattern.permute.xlu0 0
      %2201 = vperm.xlu0 %2200, %v2067
      %v2202 = vpop.permute.xlu0 %2201
      %2205 = vset.pattern.permute.xlu0 0
      %2206 = vperm.xlu0 %2205, %v2068
      %v2207 = vpop.permute.xlu0 %2206
      %2210 = vset.pattern.permute.xlu0 0
      %2211 = vperm.xlu0 %2210, %v2069
      %v2212 = vpop.permute.xlu0 %2211
      %2215 = vset.pattern.permute.xlu0 0
      %2216 = vperm.xlu0 %2215, %v2070
      %v2217 = vpop.permute.xlu0 %2216
      %2220 = vset.pattern.permute.xlu0 0
      %2221 = vperm.xlu0 %2220, %v2071
      %v2222 = vpop.permute.xlu0 %2221
      %2225 = vset.pattern.permute.xlu0 0
      %2226 = vperm.xlu0 %2225, %v2072
      %v2227 = vpop.permute.xlu0 %2226
      %2230 = vset.pattern.permute.xlu0 0
      %2231 = vperm.xlu0 %2230, %v2073
      %v2232 = vpop.permute.xlu0 %2231
      %v2234 = vmul.f32 %v2010, %v2077
      %v2235 = vmul.f32 %v2011, %v2082
      %v2236 = vmul.f32 %v2012, %v2087
      %v2237 = vmul.f32 %v2013, %v2092
      %v2238 = vmul.f32 %v2014, %v2097
      %v2239 = vmul.f32 %v2015, %v2102
      %v2240 = vmul.f32 %v2016, %v2107
      %v2241 = vmul.f32 %v2017, %v2112
      %v2242 = vmul.f32 %v2018, %v2117
      %v2243 = vmul.f32 %v2019, %v2122
      %v2244 = vmul.f32 %v2020, %v2127
      %v2245 = vmul.f32 %v2021, %v2132
      %v2246 = vmul.f32 %v2022, %v2137
      %v2247 = vmul.f32 %v2023, %v2142
      %v2248 = vmul.f32 %v2024, %v2147
      %v2249 = vmul.f32 %v2025, %v2152
      %v2250 = vmul.f32 %v2026, %v2157
      %v2251 = vmul.f32 %v2027, %v2162
      %v2252 = vmul.f32 %v2028, %v2167
      %v2253 = vmul.f32 %v2029, %v2172
      %v2254 = vmul.f32 %v2030, %v2177
      %v2255 = vmul.f32 %v2031, %v2182
      %v2256 = vmul.f32 %v2032, %v2187
      %v2257 = vmul.f32 %v2033, %v2192
      %v2258 = vmul.f32 %v2034, %v2197
      %v2259 = vmul.f32 %v2035, %v2202
      %v2260 = vmul.f32 %v2036, %v2207
      %v2261 = vmul.f32 %v2037, %v2212
      %v2262 = vmul.f32 %v2038, %v2217
      %v2263 = vmul.f32 %v2039, %v2222
      %v2264 = vmul.f32 %v2040, %v2227
      %v2265 = vmul.f32 %v2041, %v2232
      %vm2266 = vcmask 261120
      %2267 = vst.msk [vmem:[%s281] sm:$0xff] %vm2266, %v2234
      %2268 = vst.msk [vmem:[%s281 + $0x8] sm:$0xff] %vm2266, %v2235
      %2269 = vst.msk [vmem:[%s281 + $0x10] sm:$0xff] %vm2266, %v2236
      %2270 = vst.msk [vmem:[%s281 + $0x18] sm:$0xff] %vm2266, %v2237
      %2271 = vst.msk [vmem:[%s281 + $0x20] sm:$0xff] %vm2266, %v2238
      %2272 = vst.msk [vmem:[%s281 + $0x28] sm:$0xff] %vm2266, %v2239
      %2273 = vst.msk [vmem:[%s281 + $0x30] sm:$0xff] %vm2266, %v2240
      %2274 = vst.msk [vmem:[%s281 + $0x38] sm:$0xff] %vm2266, %v2241
      %2275 = vst.msk [vmem:[%s281 + $0x40] sm:$0xff] %vm2266, %v2242
      %2276 = vst.msk [vmem:[%s281 + $0x48] sm:$0xff] %vm2266, %v2243
      %2277 = vst.msk [vmem:[%s281 + $0x50] sm:$0xff] %vm2266, %v2244
      %2278 = vst.msk [vmem:[%s281 + $0x58] sm:$0xff] %vm2266, %v2245
      %2279 = vst.msk [vmem:[%s281 + $0x60] sm:$0xff] %vm2266, %v2246
      %2280 = vst.msk [vmem:[%s281 + $0x68] sm:$0xff] %vm2266, %v2247
      %2281 = vst.msk [vmem:[%s281 + $0x70] sm:$0xff] %vm2266, %v2248
      %2282 = vst.msk [vmem:[%s281 + $0x78] sm:$0xff] %vm2266, %v2249
      %2283 = vst.msk [vmem:[%s281 + $0x80] sm:$0xff] %vm2266, %v2250
      %2284 = vst.msk [vmem:[%s281 + $0x88] sm:$0xff] %vm2266, %v2251
      %2285 = vst.msk [vmem:[%s281 + $0x90] sm:$0xff] %vm2266, %v2252
      %2286 = vst.msk [vmem:[%s281 + $0x98] sm:$0xff] %vm2266, %v2253
      %2287 = vst.msk [vmem:[%s281 + $0xa0] sm:$0xff] %vm2266, %v2254
      %2288 = vst.msk [vmem:[%s281 + $0xa8] sm:$0xff] %vm2266, %v2255
      %2289 = vst.msk [vmem:[%s281 + $0xb0] sm:$0xff] %vm2266, %v2256
      %2290 = vst.msk [vmem:[%s281 + $0xb8] sm:$0xff] %vm2266, %v2257
      %2291 = vst.msk [vmem:[%s281 + $0xc0] sm:$0xff] %vm2266, %v2258
      %2292 = vst.msk [vmem:[%s281 + $0xc8] sm:$0xff] %vm2266, %v2259
      %2293 = vst.msk [vmem:[%s281 + $0xd0] sm:$0xff] %vm2266, %v2260
      %2294 = vst.msk [vmem:[%s281 + $0xd8] sm:$0xff] %vm2266, %v2261
      %2295 = vst.msk [vmem:[%s281 + $0xe0] sm:$0xff] %vm2266, %v2262
      %2296 = vst.msk [vmem:[%s281 + $0xe8] sm:$0xff] %vm2266, %v2263
      %2297 = vst.msk [vmem:[%s281 + $0xf0] sm:$0xff] %vm2266, %v2264
      %2298 = vst.msk [vmem:[%s281 + $0xf8] sm:$0xff] %vm2266, %v2265
      %s2299 = smul.u32 2, %s16
      %p2300 = scmp.lt.s32.totalorder %s2299, 3
      %s2301 = scalar_select %p2300, %s2299, 3
      %s2302 = smul.addr %s2301, 16
      %s2303 = smul.addr %s2302, 8
      %s2304 = scalar_lea.vmem %s5, %s2303
      // Predicated region
      $region41: #{aagnn_forward.1} parent=39 // pred_check
        %p2305 = pneg %p154
      $region42: #{aagnn_forward.1} parent=39 // pred_check_branch
        %2307 = sbr.rel (%p2305) target = $region44
      $region43: #{aagnn_forward.1} parent=39 // pred_region
        %s2308 = smul.u32 2, %s16
      $region44: #{aagnn_forward.1} parent=39 // pred_fallthru
        _
    $region40: #{aagnn_forward.1} parent=5 // pred_fallthru
      _
    %p2309 = scmp.le.s32.totalorder 2, %s11
    // Predicated region
    $region45: #{aagnn_forward.1} parent=5 // pred_check
      %p2310 = pneg %p2309
    $region46: #{aagnn_forward.1} parent=5 // pred_check_branch
      %2312 = sbr.rel (%p2310) target = $region48
    $region47: #{aagnn_forward.1} parent=5 // pred_region
      %s2313 = ssub.s32 %s11, 2
      // Predicated region
      $region49: #{aagnn_forward.1} parent=47 // pred_check
        %p2314 = pneg %p160
      $region50: #{aagnn_forward.1} parent=47 // pred_check_branch
        %2316 = sbr.rel (%p2314) target = $region52
      $region51: #{aagnn_forward.1} parent=47 // pred_region
        %s2317 = smul.u32 2, %s17
        %p2318 = scmp.lt.s32.totalorder %s2317, 3
        %s2319 = scalar_select %p2318, %s2317, 3
        %s2320 = smul.addr %s2319, 16
        %s2321 = smul.addr %s2320, 8
        %s2322 = scalar_lea.vmem %s5, %s2321
      $region52: #{aagnn_forward.1} parent=47 // pred_fallthru
        _
    $region48: #{aagnn_forward.1} parent=5 // pred_fallthru
      _
  $region6: #{aagnn_forward.1} parent=0 // loop_footer
    %s15 = sadd.s32 1, %s11
  $region7: #{aagnn_forward.1} parent=0 // loop_footer_branch
    %10 = sbr.rel target = $region3
  $region8: #{aagnn_forward.1} parent=0 // loop_exit
    _

</llo_original>
